<compile_context>
chip_gen: v6e
topology: v6e:2x2x1
jax: 0.10.0
libtpu: 0.0.40
codegen_flags: <defaults>
</compile_context>

<pallas_src>
import jax
import jax.numpy as jnp
from jax.experimental import pallas as pl
from jax.experimental.pallas import tpu as pltpu


# ----------------------------------------------------------------------------
# Pallas kernel: serial LSTM recurrence + batched attention/fc head
# ----------------------------------------------------------------------------
def decoder_kernel(gx_ref, h0_ref, c0_ref, w_h_ref, w_head_ref, add_ref,
                   w_alpha_ref, sel_ref, spf_ref, w_fc_ref, b_fc_ref,
                   logit_ref, hs_scr):
    B, H = h0_ref.shape
    TB = gx_ref.shape[0]
    T = TB // B
    P = sel_ref.shape[1] // B
    f32 = jnp.float32

    # ---- serial recurrence: only the LSTM cell is on the dependence chain ---
    w_h = w_h_ref[...]                       # [H, 5H] fused [w_hh | w_hg]
    h = h0_ref[...]                          # [B, H]
    c = c0_ref[...]                          # [B, H]
    for t in range(T):                       # static unroll; all indices static
        g = gx_ref[pl.ds(t * B, B), :] + jnp.dot(h, w_h,
                                                 preferred_element_type=f32)
        i_g = jax.nn.sigmoid(g[:, 0:H])
        f_g = jax.nn.sigmoid(g[:, H:2 * H])
        g_g = jnp.tanh(g[:, 2 * H:3 * H])
        o_g = jax.nn.sigmoid(g[:, 3 * H:4 * H])
        sen = jax.nn.sigmoid(g[:, 4 * H:5 * H])     # sentinel gate
        c = f_g * c + i_g * g_g
        tc = jnp.tanh(c)
        h = o_g * tc
        s = sen * tc
        hs_scr[pl.ds(t * B, B), :] = jnp.concatenate([h, s], axis=-1)

    # ---- batched head over all T*B rows (off the serial path) ---------------
    hs = hs_scr[...]                         # [TB, 2H]
    h_all = hs[:, 0:H]
    s_all = hs[:, H:2 * H]

    # fused hidden/sentinel attention projection; pixel block already tiled
    # across P, biases pre-folded into add_ref.  Lane-dense [TB, P*A + A].
    att = jnp.tanh(jnp.dot(hs, w_head_ref[...], preferred_element_type=f32)
                   + add_ref[...])
    # att2weight as one block-diagonal matmul -> [TB, P+1]
    alpha = jnp.dot(att, w_alpha_ref[...], preferred_element_type=f32)

    # softmax over the (P + 1) slots [pixels..., sentinel]
    m = jnp.max(alpha, axis=1, keepdims=True)
    e = jnp.exp(alpha - m)
    w = e / jnp.sum(e, axis=1, keepdims=True)        # [TB, P+1]

    w_pix = w[:, 0:P]                                # [TB, P]
    w_sen = w[:, P:P + 1]                            # [TB, 1]
    # per-row batch selection turns the batched weighted sum into one matmul
    w2 = jnp.concatenate([w_pix] * B, axis=1) * sel_ref[...]        # [TB, B*P]
    ctx = jnp.dot(w2, spf_ref[...], preferred_element_type=f32) + s_all * w_sen

    # TODO(synk): nn.Dropout(0.5) treated as identity (eval mode).
    logit_ref[...] = (jnp.dot(h_all + ctx, w_fc_ref[...],
                              preferred_element_type=f32) + b_fc_ref[...])


# ----------------------------------------------------------------------------
# Wrapper: hoisted time-invariant work + pallas_call
# ----------------------------------------------------------------------------
def lstm_decoder_attention_forward(params, global_features, spatial_features, cap, max_len):
    B = global_features.shape[0]
    P = spatial_features.shape[1]
    H = params["w_hh"].shape[1]
    E = params["embed"].shape[1]
    V = params["fc_w"].shape[0]
    A = params["v2a_w"].shape[0]
    T = int(max_len)
    TB = T * B
    V_PAD = max(128, ((V + 127) // 128) * 128)       # lane-dense logits store
    f32 = jnp.float32

    # --- glue: weight-normed init linears (effective weight == stored weight) ---
    h0 = (global_features @ params["init_h_w"].T + params["init_h_b"]).astype(f32)   # [B, H]
    c0 = (global_features @ params["init_c_w"].T + params["init_c_b"]).astype(f32)   # [B, H]

    # --- image2hidden projection + time-invariant visual2att projection ---
    sp_proj = (spatial_features @ params["i2h_w"].T + params["i2h_b"]).astype(f32)   # [B, P, H]
    visual_att = (sp_proj @ params["v2a_w"].T + params["v2a_b"]).astype(f32)          # [B, P, A]

    # --- embedding lookup + ALL x-dependent matmuls as ONE dense [TB, 5H] ---
    # gates_x[t*B+b, :] = [ x @ w_ih.T + b_ih + b_hh | x @ xg_w.T + xg_b + hg_b ]
    emb = jnp.transpose(params["embed"][cap], (1, 0, 2)).astype(f32)                  # [T, B, E]
    w_x_fused = jnp.concatenate([params["w_ih"].T, params["xg_w"].T], axis=1)         # [E, 5H]
    b_fused = jnp.concatenate([params["b_ih"] + params["b_hh"],
                               params["xg_b"] + params["hg_b"]])                      # [5H]
    gates_x = (emb.reshape(TB, E) @ w_x_fused + b_fused).astype(f32)                  # [TB, 5H]

    # --- fused recurrent weight on h_old: [w_hh | w_hg] ---
    w_h_fused = jnp.concatenate([params["w_hh"].T, params["hg_w"].T], axis=1).astype(f32)  # [H, 5H]

    # --- batched attention head operands (time-invariant, built once) ---
    w_h2a = params["h2a_w"].T.astype(f32)            # [H, A]
    w_s2a = params["s2a_w"].T.astype(f32)            # [H, A]
    # [h | s] @ w_head -> [ hidden_att tiled over P | hidden_att + sen_att ]
    w_head = jnp.concatenate(
        [jnp.concatenate([jnp.tile(w_h2a, (1, P)), w_h2a], axis=1),
         jnp.concatenate([jnp.zeros((H, P * A), f32), w_s2a], axis=1)],
        axis=0).astype(f32)                                                            # [2H, P*A+A]

    # additive term with b_h2a / b_s2a folded in (b_a2w dropped: cancels in softmax)
    va_flat = (visual_att + params["h2a_b"]).reshape(B, P * A)                         # [B, P*A]
    sen_bias = jnp.broadcast_to((params["h2a_b"] + params["s2a_b"]).reshape(1, A), (B, A))
    add_head = jnp.tile(jnp.concatenate([va_flat, sen_bias], axis=1), (T, 1)).astype(f32)  # [TB, P*A+A]

    # att2weight as a block-diagonal reduction matrix -> [P*A+A, P+1]
    a2w = params["a2w_w"][0].astype(f32)                                               # [A]
    w_alpha = jnp.zeros((P * A + A, P + 1), f32)
    w_alpha = w_alpha.at[:P * A, :P].set(jnp.kron(jnp.eye(P, dtype=f32), a2w[:, None]))
    w_alpha = w_alpha.at[P * A:, P].set(a2w)

    # batch-selection mask for the context matmul: sel[r, b'*P+p] = (b' == r % B)
    row_b = jnp.arange(TB) % B
    col_b = jnp.repeat(jnp.arange(B), P)
    sel_mask = (row_b[:, None] == col_b[None, :]).astype(f32)                          # [TB, B*P]
    sp_flat = sp_proj.reshape(B * P, H).astype(f32)                                    # [B*P, H]

    # --- lane-dense padded output head (V -> V_PAD, multiple of 128) ---
    w_fc = jnp.zeros((H, V_PAD), f32).at[:, :V].set(params["fc_w"].T.astype(f32))
    b_fc = jnp.zeros((1, V_PAD), f32).at[0, :V].set(params["fc_b"].astype(f32))

    inputs = [gates_x, h0, c0, w_h_fused, w_head, add_head, w_alpha,
              sel_mask, sp_flat, w_fc, b_fc]

    vmem_spec = pl.BlockSpec(memory_space=pltpu.MemorySpace.VMEM)
    logits = pl.pallas_call(
        decoder_kernel,
        out_shape=jax.ShapeDtypeStruct((TB, V_PAD), f32),
        in_specs=[vmem_spec] * len(inputs),
        out_specs=vmem_spec,
        scratch_shapes=[pltpu.VMEM((TB, 2 * H), f32)],
    )(*inputs)

    # rows are ordered r = t*B + b -> [T, B, V] -> [B, T, V]
    return jnp.transpose(logits.reshape(T, B, V_PAD)[:, :, :V], (1, 0, 2))


# ----------------------------------------------------------------------------
# Pure-JAX reference (mirrors the PyTorch forward, dropout = identity)
# ----------------------------------------------------------------------------
def reference_forward(params, global_features, spatial_features, cap, max_len):
    H = params["w_hh"].shape[1]
    h = global_features @ params["init_h_w"].T + params["init_h_b"]
    c = global_features @ params["init_c_w"].T + params["init_c_b"]
    sp = spatial_features @ params["i2h_w"].T + params["i2h_b"]
    emb = params["embed"][cap]                                 # [B, T, E]
    outs = []
    for t in range(max_len):
        x = emb[:, t, :]
        gates = x @ params["w_ih"].T + params["b_ih"] + h @ params["w_hh"].T + params["b_hh"]
        i_g = jax.nn.sigmoid(gates[:, 0:H])
        f_g = jax.nn.sigmoid(gates[:, H:2 * H])
        g_g = jnp.tanh(gates[:, 2 * H:3 * H])
        o_g = jax.nn.sigmoid(gates[:, 3 * H:4 * H])
        c_new = f_g * c + i_g * g_g
        h_new = o_g * jnp.tanh(c_new)
        sen_gate = jax.nn.sigmoid(x @ params["xg_w"].T + params["xg_b"]
                                  + h @ params["hg_w"].T + params["hg_b"])
        st = sen_gate * jnp.tanh(c_new)
        h, c = h_new, c_new

        visual_att = sp @ params["v2a_w"].T + params["v2a_b"]          # [B, P, A]
        sen_att = st @ params["s2a_w"].T + params["s2a_b"]             # [B, A]
        hidden_att = h @ params["h2a_w"].T + params["h2a_b"]           # [B, A]
        concat_att = jnp.concatenate([visual_att, sen_att[:, None, :]], axis=1)
        alpha = (jnp.tanh(concat_att + hidden_att[:, None, :]) @ params["a2w_w"].T
                 + params["a2w_b"])[:, :, 0]
        w = jax.nn.softmax(alpha, axis=1)
        concat_feat = jnp.concatenate([sp, st[:, None, :]], axis=1)
        context = jnp.sum(concat_feat * w[:, :, None], axis=1)
        pred = (h + context) @ params["fc_w"].T + params["fc_b"]
        outs.append(pred)
    return jnp.stack(outs, axis=1)


# ----------------------------------------------------------------------------
# main
# ----------------------------------------------------------------------------
if __name__ == "__main__":
    # config-derived sizes (small, consistent with the module)
    B, P, T = 2, 16, 8
    IMAGE_DIM, EMBED_DIM, HIDDEN_DIM, ATT_DIM, VOCAB = 32, 16, 32, 32, 64

    key = jax.random.PRNGKey(0)
    keys = iter(jax.random.split(key, 64))

    def w(shape, scale=0.1):
        return (jax.random.normal(next(keys), shape, dtype=jnp.float32) * scale)

    params = {
        "embed":    jax.random.uniform(next(keys), (VOCAB, EMBED_DIM),
                                       minval=-0.1, maxval=0.1, dtype=jnp.float32),
        # AdaptiveLSTMCell
        "w_ih": w((4 * HIDDEN_DIM, EMBED_DIM)),  "b_ih": w((4 * HIDDEN_DIM,)),
        "w_hh": w((4 * HIDDEN_DIM, HIDDEN_DIM)), "b_hh": w((4 * HIDDEN_DIM,)),
        "xg_w": w((HIDDEN_DIM, EMBED_DIM)),      "xg_b": w((HIDDEN_DIM,)),
        "hg_w": w((HIDDEN_DIM, HIDDEN_DIM)),     "hg_b": w((HIDDEN_DIM,)),
        # image2hidden
        "i2h_w": w((HIDDEN_DIM, IMAGE_DIM)),     "i2h_b": w((HIDDEN_DIM,)),
        # Spatial_Attention
        "v2a_w": w((ATT_DIM, HIDDEN_DIM)),       "v2a_b": w((ATT_DIM,)),
        "s2a_w": w((ATT_DIM, HIDDEN_DIM)),       "s2a_b": w((ATT_DIM,)),
        "h2a_w": w((ATT_DIM, HIDDEN_DIM)),       "h2a_b": w((ATT_DIM,)),
        "a2w_w": w((1, ATT_DIM)),                "a2w_b": w((1,)),
        # weight-normed init linears and output head (effective weights)
        # TODO(synk): weight_norm is assumed pre-merged into effective weights.
        "init_h_w": w((HIDDEN_DIM, IMAGE_DIM)),  "init_h_b": w((HIDDEN_DIM,)),
        "init_c_w": w((HIDDEN_DIM, IMAGE_DIM)),  "init_c_b": w((HIDDEN_DIM,)),
        "fc_w": jax.random.uniform(next(keys), (VOCAB, HIDDEN_DIM),
                                   minval=-0.1, maxval=0.1, dtype=jnp.float32),
        "fc_b": jnp.zeros((VOCAB,), dtype=jnp.float32),
    }

    global_features = jax.random.normal(next(keys), (B, IMAGE_DIM), dtype=jnp.float32)
    spatial_features = jax.random.normal(next(keys), (B, P, IMAGE_DIM), dtype=jnp.float32)
    cap = jax.random.randint(next(keys), (B, T), 0, VOCAB)
    cap_len = [T, T]
    max_len = max(cap_len)

    logits = lstm_decoder_attention_forward(params, global_features, spatial_features,
                                            cap, max_len)
    logits = jax.block_until_ready(logits)

    ref = reference_forward(params, global_features, spatial_features, cap, max_len)
    ref = jax.block_until_ready(ref)

    assert logits.shape == (B, T, VOCAB)
    err = float(jnp.max(jnp.abs(logits - ref)))
    assert err < 5e-4, f"mismatch vs reference: max abs err = {err}"
    print("KERNEL_OK")
</pallas_src>

<mosaic_0001>
module attributes {stable_mosaic.version = 11 : i64} {
  func.func @decoder_kernel(%arg0: memref<16x160xf32, #tpu.memory_space<vmem>>, %arg1: memref<2x32xf32, #tpu.memory_space<vmem>>, %arg2: memref<2x32xf32, #tpu.memory_space<vmem>>, %arg3: memref<32x160xf32, #tpu.memory_space<vmem>>, %arg4: memref<64x544xf32, #tpu.memory_space<vmem>>, %arg5: memref<16x544xf32, #tpu.memory_space<vmem>>, %arg6: memref<544x17xf32, #tpu.memory_space<vmem>>, %arg7: memref<16x32xf32, #tpu.memory_space<vmem>>, %arg8: memref<32x32xf32, #tpu.memory_space<vmem>>, %arg9: memref<32x128xf32, #tpu.memory_space<vmem>>, %arg10: memref<1x128xf32, #tpu.memory_space<vmem>>, %arg11: memref<16x128xf32, #tpu.memory_space<vmem>>, %arg12: memref<16x64xf32, #tpu.memory_space<vmem>>) attributes {dimension_semantics = [], scalar_prefetch = 0 : i64, scratch_operands = 1 : i64, tpu.core_type = #tpu.core_type<tc>} {
    %c0 = arith.constant 0 : index
    %c0_0 = arith.constant 0 : index
    %0 = vector.load %arg3[%c0, %c0_0] : memref<32x160xf32, #tpu.memory_space<vmem>>, vector<32x160xf32>
    %c0_1 = arith.constant 0 : index
    %c0_2 = arith.constant 0 : index
    %1 = vector.load %arg1[%c0_1, %c0_2] : memref<2x32xf32, #tpu.memory_space<vmem>>, vector<2x32xf32>
    %c0_3 = arith.constant 0 : index
    %c0_4 = arith.constant 0 : index
    %2 = vector.load %arg2[%c0_3, %c0_4] : memref<2x32xf32, #tpu.memory_space<vmem>>, vector<2x32xf32>
    %c0_5 = arith.constant 0 : index
    %c0_6 = arith.constant 0 : index
    %3 = vector.load %arg0[%c0_5, %c0_6] : memref<16x160xf32, #tpu.memory_space<vmem>>, vector<2x160xf32>
    %cst = arith.constant dense<0.000000e+00> : vector<2x160xf32>
    %4 = tpu.matmul %1, %0, %cst {dimension_numbers = #tpu.dot_dimension_numbers<[1], [0], [0], [1], [0, 0, 1, 1], [], []>} : vector<2x32xf32>, vector<32x160xf32>, vector<2x160xf32> -> vector<2x160xf32>
    %5 = arith.addf %3, %4 : vector<2x160xf32>
    %6 = vector.extract_strided_slice %5 {offsets = [0, 0], sizes = [2, 32], strides = [1, 1]} : vector<2x160xf32> to vector<2x32xf32>
    %7 = arith.negf %6 : vector<2x32xf32>
    %8 = math.exp %7 : vector<2x32xf32>
    %cst_7 = arith.constant 1.000000e+00 : f32
    %9 = vector.broadcast %cst_7 : f32 to vector<2x32xf32>
    %10 = arith.addf %9, %8 : vector<2x32xf32>
    %11 = arith.divf %9, %10 : vector<2x32xf32>
    %12 = vector.extract_strided_slice %5 {offsets = [0, 32], sizes = [2, 32], strides = [1, 1]} : vector<2x160xf32> to vector<2x32xf32>
    %13 = arith.negf %12 : vector<2x32xf32>
    %14 = math.exp %13 : vector<2x32xf32>
    %cst_8 = arith.constant 1.000000e+00 : f32
    %15 = vector.broadcast %cst_8 : f32 to vector<2x32xf32>
    %16 = arith.addf %15, %14 : vector<2x32xf32>
    %17 = arith.divf %15, %16 : vector<2x32xf32>
    %18 = vector.extract_strided_slice %5 {offsets = [0, 64], sizes = [2, 32], strides = [1, 1]} : vector<2x160xf32> to vector<2x32xf32>
    %19 = math.tanh %18 : vector<2x32xf32>
    %20 = vector.extract_strided_slice %5 {offsets = [0, 96], sizes = [2, 32], strides = [1, 1]} : vector<2x160xf32> to vector<2x32xf32>
    %21 = arith.negf %20 : vector<2x32xf32>
    %22 = math.exp %21 : vector<2x32xf32>
    %cst_9 = arith.constant 1.000000e+00 : f32
    %23 = vector.broadcast %cst_9 : f32 to vector<2x32xf32>
    %24 = arith.addf %23, %22 : vector<2x32xf32>
    %25 = arith.divf %23, %24 : vector<2x32xf32>
    %26 = vector.extract_strided_slice %5 {offsets = [0, 128], sizes = [2, 32], strides = [1, 1]} : vector<2x160xf32> to vector<2x32xf32>
    %27 = arith.negf %26 : vector<2x32xf32>
    %28 = math.exp %27 : vector<2x32xf32>
    %cst_10 = arith.constant 1.000000e+00 : f32
    %29 = vector.broadcast %cst_10 : f32 to vector<2x32xf32>
    %30 = arith.addf %29, %28 : vector<2x32xf32>
    %31 = arith.divf %29, %30 : vector<2x32xf32>
    %32 = arith.mulf %17, %2 : vector<2x32xf32>
    %33 = arith.mulf %11, %19 : vector<2x32xf32>
    %34 = arith.addf %32, %33 : vector<2x32xf32>
    %35 = math.tanh %34 : vector<2x32xf32>
    %36 = arith.mulf %25, %35 : vector<2x32xf32>
    %37 = arith.mulf %31, %35 : vector<2x32xf32>
    %38 = tpu.concatenate %36, %37 in 1 : vector<2x32xf32>, vector<2x32xf32> -> vector<2x64xf32>
    %c0_11 = arith.constant 0 : index
    %c0_12 = arith.constant 0 : index
    %39 = vector.load %arg12[%c0_11, %c0_12] : memref<16x64xf32, #tpu.memory_space<vmem>>, vector<2x64xf32>
    tpu.vector_store %arg12[%c0_11, %c0_12], %38 {strides = array<i32>} : memref<16x64xf32, #tpu.memory_space<vmem>>, vector<2x64xf32>,
    %c2 = arith.constant 2 : index
    %c0_13 = arith.constant 0 : index
    %40 = vector.load %arg0[%c2, %c0_13] : memref<16x160xf32, #tpu.memory_space<vmem>>, vector<2x160xf32>
    %cst_14 = arith.constant dense<0.000000e+00> : vector<2x160xf32>
    %41 = tpu.matmul %36, %0, %cst_14 {dimension_numbers = #tpu.dot_dimension_numbers<[1], [0], [0], [1], [0, 0, 1, 1], [], []>} : vector<2x32xf32>, vector<32x160xf32>, vector<2x160xf32> -> vector<2x160xf32>
    %42 = arith.addf %40, %41 : vector<2x160xf32>
    %43 = vector.extract_strided_slice %42 {offsets = [0, 0], sizes = [2, 32], strides = [1, 1]} : vector<2x160xf32> to vector<2x32xf32>
    %44 = arith.negf %43 : vector<2x32xf32>
    %45 = math.exp %44 : vector<2x32xf32>
    %cst_15 = arith.constant 1.000000e+00 : f32
    %46 = vector.broadcast %cst_15 : f32 to vector<2x32xf32>
    %47 = arith.addf %46, %45 : vector<2x32xf32>
    %48 = arith.divf %46, %47 : vector<2x32xf32>
    %49 = vector.extract_strided_slice %42 {offsets = [0, 32], sizes = [2, 32], strides = [1, 1]} : vector<2x160xf32> to vector<2x32xf32>
    %50 = arith.negf %49 : vector<2x32xf32>
    %51 = math.exp %50 : vector<2x32xf32>
    %cst_16 = arith.constant 1.000000e+00 : f32
    %52 = vector.broadcast %cst_16 : f32 to vector<2x32xf32>
    %53 = arith.addf %52, %51 : vector<2x32xf32>
    %54 = arith.divf %52, %53 : vector<2x32xf32>
    %55 = vector.extract_strided_slice %42 {offsets = [0, 64], sizes = [2, 32], strides = [1, 1]} : vector<2x160xf32> to vector<2x32xf32>
    %56 = math.tanh %55 : vector<2x32xf32>
    %57 = vector.extract_strided_slice %42 {offsets = [0, 96], sizes = [2, 32], strides = [1, 1]} : vector<2x160xf32> to vector<2x32xf32>
    %58 = arith.negf %57 : vector<2x32xf32>
    %59 = math.exp %58 : vector<2x32xf32>
    %cst_17 = arith.constant 1.000000e+00 : f32
    %60 = vector.broadcast %cst_17 : f32 to vector<2x32xf32>
    %61 = arith.addf %60, %59 : vector<2x32xf32>
    %62 = arith.divf %60, %61 : vector<2x32xf32>
    %63 = vector.extract_strided_slice %42 {offsets = [0, 128], sizes = [2, 32], strides = [1, 1]} : vector<2x160xf32> to vector<2x32xf32>
    %64 = arith.negf %63 : vector<2x32xf32>
    %65 = math.exp %64 : vector<2x32xf32>
    %cst_18 = arith.constant 1.000000e+00 : f32
    %66 = vector.broadcast %cst_18 : f32 to vector<2x32xf32>
    %67 = arith.addf %66, %65 : vector<2x32xf32>
    %68 = arith.divf %66, %67 : vector<2x32xf32>
    %69 = arith.mulf %54, %34 : vector<2x32xf32>
    %70 = arith.mulf %48, %56 : vector<2x32xf32>
    %71 = arith.addf %69, %70 : vector<2x32xf32>
    %72 = math.tanh %71 : vector<2x32xf32>
    %73 = arith.mulf %62, %72 : vector<2x32xf32>
    %74 = arith.mulf %68, %72 : vector<2x32xf32>
    %75 = tpu.concatenate %73, %74 in 1 : vector<2x32xf32>, vector<2x32xf32> -> vector<2x64xf32>
    %c2_19 = arith.constant 2 : index
    %c0_20 = arith.constant 0 : index
    %76 = vector.load %arg12[%c2_19, %c0_20] : memref<16x64xf32, #tpu.memory_space<vmem>>, vector<2x64xf32>
    tpu.vector_store %arg12[%c2_19, %c0_20], %75 {strides = array<i32>} : memref<16x64xf32, #tpu.memory_space<vmem>>, vector<2x64xf32>,
    %c4 = arith.constant 4 : index
    %c0_21 = arith.constant 0 : index
    %77 = vector.load %arg0[%c4, %c0_21] : memref<16x160xf32, #tpu.memory_space<vmem>>, vector<2x160xf32>
    %cst_22 = arith.constant dense<0.000000e+00> : vector<2x160xf32>
    %78 = tpu.matmul %73, %0, %cst_22 {dimension_numbers = #tpu.dot_dimension_numbers<[1], [0], [0], [1], [0, 0, 1, 1], [], []>} : vector<2x32xf32>, vector<32x160xf32>, vector<2x160xf32> -> vector<2x160xf32>
    %79 = arith.addf %77, %78 : vector<2x160xf32>
    %80 = vector.extract_strided_slice %79 {offsets = [0, 0], sizes = [2, 32], strides = [1, 1]} : vector<2x160xf32> to vector<2x32xf32>
    %81 = arith.negf %80 : vector<2x32xf32>
    %82 = math.exp %81 : vector<2x32xf32>
    %cst_23 = arith.constant 1.000000e+00 : f32
    %83 = vector.broadcast %cst_23 : f32 to vector<2x32xf32>
    %84 = arith.addf %83, %82 : vector<2x32xf32>
    %85 = arith.divf %83, %84 : vector<2x32xf32>
    %86 = vector.extract_strided_slice %79 {offsets = [0, 32], sizes = [2, 32], strides = [1, 1]} : vector<2x160xf32> to vector<2x32xf32>
    %87 = arith.negf %86 : vector<2x32xf32>
    %88 = math.exp %87 : vector<2x32xf32>
    %cst_24 = arith.constant 1.000000e+00 : f32
    %89 = vector.broadcast %cst_24 : f32 to vector<2x32xf32>
    %90 = arith.addf %89, %88 : vector<2x32xf32>
    %91 = arith.divf %89, %90 : vector<2x32xf32>
    %92 = vector.extract_strided_slice %79 {offsets = [0, 64], sizes = [2, 32], strides = [1, 1]} : vector<2x160xf32> to vector<2x32xf32>
    %93 = math.tanh %92 : vector<2x32xf32>
    %94 = vector.extract_strided_slice %79 {offsets = [0, 96], sizes = [2, 32], strides = [1, 1]} : vector<2x160xf32> to vector<2x32xf32>
    %95 = arith.negf %94 : vector<2x32xf32>
    %96 = math.exp %95 : vector<2x32xf32>
    %cst_25 = arith.constant 1.000000e+00 : f32
    %97 = vector.broadcast %cst_25 : f32 to vector<2x32xf32>
    %98 = arith.addf %97, %96 : vector<2x32xf32>
    %99 = arith.divf %97, %98 : vector<2x32xf32>
    %100 = vector.extract_strided_slice %79 {offsets = [0, 128], sizes = [2, 32], strides = [1, 1]} : vector<2x160xf32> to vector<2x32xf32>
    %101 = arith.negf %100 : vector<2x32xf32>
    %102 = math.exp %101 : vector<2x32xf32>
    %cst_26 = arith.constant 1.000000e+00 : f32
    %103 = vector.broadcast %cst_26 : f32 to vector<2x32xf32>
    %104 = arith.addf %103, %102 : vector<2x32xf32>
    %105 = arith.divf %103, %104 : vector<2x32xf32>
    %106 = arith.mulf %91, %71 : vector<2x32xf32>
    %107 = arith.mulf %85, %93 : vector<2x32xf32>
    %108 = arith.addf %106, %107 : vector<2x32xf32>
    %109 = math.tanh %108 : vector<2x32xf32>
    %110 = arith.mulf %99, %109 : vector<2x32xf32>
    %111 = arith.mulf %105, %109 : vector<2x32xf32>
    %112 = tpu.concatenate %110, %111 in 1 : vector<2x32xf32>, vector<2x32xf32> -> vector<2x64xf32>
    %c4_27 = arith.constant 4 : index
    %c0_28 = arith.constant 0 : index
    %113 = vector.load %arg12[%c4_27, %c0_28] : memref<16x64xf32, #tpu.memory_space<vmem>>, vector<2x64xf32>
    tpu.vector_store %arg12[%c4_27, %c0_28], %112 {strides = array<i32>} : memref<16x64xf32, #tpu.memory_space<vmem>>, vector<2x64xf32>,
    %c6 = arith.constant 6 : index
    %c0_29 = arith.constant 0 : index
    %114 = vector.load %arg0[%c6, %c0_29] : memref<16x160xf32, #tpu.memory_space<vmem>>, vector<2x160xf32>
    %cst_30 = arith.constant dense<0.000000e+00> : vector<2x160xf32>
    %115 = tpu.matmul %110, %0, %cst_30 {dimension_numbers = #tpu.dot_dimension_numbers<[1], [0], [0], [1], [0, 0, 1, 1], [], []>} : vector<2x32xf32>, vector<32x160xf32>, vector<2x160xf32> -> vector<2x160xf32>
    %116 = arith.addf %114, %115 : vector<2x160xf32>
    %117 = vector.extract_strided_slice %116 {offsets = [0, 0], sizes = [2, 32], strides = [1, 1]} : vector<2x160xf32> to vector<2x32xf32>
    %118 = arith.negf %117 : vector<2x32xf32>
    %119 = math.exp %118 : vector<2x32xf32>
    %cst_31 = arith.constant 1.000000e+00 : f32
    %120 = vector.broadcast %cst_31 : f32 to vector<2x32xf32>
    %121 = arith.addf %120, %119 : vector<2x32xf32>
    %122 = arith.divf %120, %121 : vector<2x32xf32>
    %123 = vector.extract_strided_slice %116 {offsets = [0, 32], sizes = [2, 32], strides = [1, 1]} : vector<2x160xf32> to vector<2x32xf32>
    %124 = arith.negf %123 : vector<2x32xf32>
    %125 = math.exp %124 : vector<2x32xf32>
    %cst_32 = arith.constant 1.000000e+00 : f32
    %126 = vector.broadcast %cst_32 : f32 to vector<2x32xf32>
    %127 = arith.addf %126, %125 : vector<2x32xf32>
    %128 = arith.divf %126, %127 : vector<2x32xf32>
    %129 = vector.extract_strided_slice %116 {offsets = [0, 64], sizes = [2, 32], strides = [1, 1]} : vector<2x160xf32> to vector<2x32xf32>
    %130 = math.tanh %129 : vector<2x32xf32>
    %131 = vector.extract_strided_slice %116 {offsets = [0, 96], sizes = [2, 32], strides = [1, 1]} : vector<2x160xf32> to vector<2x32xf32>
    %132 = arith.negf %131 : vector<2x32xf32>
    %133 = math.exp %132 : vector<2x32xf32>
    %cst_33 = arith.constant 1.000000e+00 : f32
    %134 = vector.broadcast %cst_33 : f32 to vector<2x32xf32>
    %135 = arith.addf %134, %133 : vector<2x32xf32>
    %136 = arith.divf %134, %135 : vector<2x32xf32>
    %137 = vector.extract_strided_slice %116 {offsets = [0, 128], sizes = [2, 32], strides = [1, 1]} : vector<2x160xf32> to vector<2x32xf32>
    %138 = arith.negf %137 : vector<2x32xf32>
    %139 = math.exp %138 : vector<2x32xf32>
    %cst_34 = arith.constant 1.000000e+00 : f32
    %140 = vector.broadcast %cst_34 : f32 to vector<2x32xf32>
    %141 = arith.addf %140, %139 : vector<2x32xf32>
    %142 = arith.divf %140, %141 : vector<2x32xf32>
    %143 = arith.mulf %128, %108 : vector<2x32xf32>
    %144 = arith.mulf %122, %130 : vector<2x32xf32>
    %145 = arith.addf %143, %144 : vector<2x32xf32>
    %146 = math.tanh %145 : vector<2x32xf32>
    %147 = arith.mulf %136, %146 : vector<2x32xf32>
    %148 = arith.mulf %142, %146 : vector<2x32xf32>
    %149 = tpu.concatenate %147, %148 in 1 : vector<2x32xf32>, vector<2x32xf32> -> vector<2x64xf32>
    %c6_35 = arith.constant 6 : index
    %c0_36 = arith.constant 0 : index
    %150 = vector.load %arg12[%c6_35, %c0_36] : memref<16x64xf32, #tpu.memory_space<vmem>>, vector<2x64xf32>
    tpu.vector_store %arg12[%c6_35, %c0_36], %149 {strides = array<i32>} : memref<16x64xf32, #tpu.memory_space<vmem>>, vector<2x64xf32>,
    %c8 = arith.constant 8 : index
    %c0_37 = arith.constant 0 : index
    %151 = vector.load %arg0[%c8, %c0_37] : memref<16x160xf32, #tpu.memory_space<vmem>>, vector<2x160xf32>
    %cst_38 = arith.constant dense<0.000000e+00> : vector<2x160xf32>
    %152 = tpu.matmul %147, %0, %cst_38 {dimension_numbers = #tpu.dot_dimension_numbers<[1], [0], [0], [1], [0, 0, 1, 1], [], []>} : vector<2x32xf32>, vector<32x160xf32>, vector<2x160xf32> -> vector<2x160xf32>
    %153 = arith.addf %151, %152 : vector<2x160xf32>
    %154 = vector.extract_strided_slice %153 {offsets = [0, 0], sizes = [2, 32], strides = [1, 1]} : vector<2x160xf32> to vector<2x32xf32>
    %155 = arith.negf %154 : vector<2x32xf32>
    %156 = math.exp %155 : vector<2x32xf32>
    %cst_39 = arith.constant 1.000000e+00 : f32
    %157 = vector.broadcast %cst_39 : f32 to vector<2x32xf32>
    %158 = arith.addf %157, %156 : vector<2x32xf32>
    %159 = arith.divf %157, %158 : vector<2x32xf32>
    %160 = vector.extract_strided_slice %153 {offsets = [0, 32], sizes = [2, 32], strides = [1, 1]} : vector<2x160xf32> to vector<2x32xf32>
    %161 = arith.negf %160 : vector<2x32xf32>
    %162 = math.exp %161 : vector<2x32xf32>
    %cst_40 = arith.constant 1.000000e+00 : f32
    %163 = vector.broadcast %cst_40 : f32 to vector<2x32xf32>
    %164 = arith.addf %163, %162 : vector<2x32xf32>
    %165 = arith.divf %163, %164 : vector<2x32xf32>
    %166 = vector.extract_strided_slice %153 {offsets = [0, 64], sizes = [2, 32], strides = [1, 1]} : vector<2x160xf32> to vector<2x32xf32>
    %167 = math.tanh %166 : vector<2x32xf32>
    %168 = vector.extract_strided_slice %153 {offsets = [0, 96], sizes = [2, 32], strides = [1, 1]} : vector<2x160xf32> to vector<2x32xf32>
    %169 = arith.negf %168 : vector<2x32xf32>
    %170 = math.exp %169 : vector<2x32xf32>
    %cst_41 = arith.constant 1.000000e+00 : f32
    %171 = vector.broadcast %cst_41 : f32 to vector<2x32xf32>
    %172 = arith.addf %171, %170 : vector<2x32xf32>
    %173 = arith.divf %171, %172 : vector<2x32xf32>
    %174 = vector.extract_strided_slice %153 {offsets = [0, 128], sizes = [2, 32], strides = [1, 1]} : vector<2x160xf32> to vector<2x32xf32>
    %175 = arith.negf %174 : vector<2x32xf32>
    %176 = math.exp %175 : vector<2x32xf32>
    %cst_42 = arith.constant 1.000000e+00 : f32
    %177 = vector.broadcast %cst_42 : f32 to vector<2x32xf32>
    %178 = arith.addf %177, %176 : vector<2x32xf32>
    %179 = arith.divf %177, %178 : vector<2x32xf32>
    %180 = arith.mulf %165, %145 : vector<2x32xf32>
    %181 = arith.mulf %159, %167 : vector<2x32xf32>
    %182 = arith.addf %180, %181 : vector<2x32xf32>
    %183 = math.tanh %182 : vector<2x32xf32>
    %184 = arith.mulf %173, %183 : vector<2x32xf32>
    %185 = arith.mulf %179, %183 : vector<2x32xf32>
    %186 = tpu.concatenate %184, %185 in 1 : vector<2x32xf32>, vector<2x32xf32> -> vector<2x64xf32>
    %c8_43 = arith.constant 8 : index
    %c0_44 = arith.constant 0 : index
    %187 = vector.load %arg12[%c8_43, %c0_44] : memref<16x64xf32, #tpu.memory_space<vmem>>, vector<2x64xf32>
    tpu.vector_store %arg12[%c8_43, %c0_44], %186 {strides = array<i32>} : memref<16x64xf32, #tpu.memory_space<vmem>>, vector<2x64xf32>,
    %c10 = arith.constant 10 : index
    %c0_45 = arith.constant 0 : index
    %188 = vector.load %arg0[%c10, %c0_45] : memref<16x160xf32, #tpu.memory_space<vmem>>, vector<2x160xf32>
    %cst_46 = arith.constant dense<0.000000e+00> : vector<2x160xf32>
    %189 = tpu.matmul %184, %0, %cst_46 {dimension_numbers = #tpu.dot_dimension_numbers<[1], [0], [0], [1], [0, 0, 1, 1], [], []>} : vector<2x32xf32>, vector<32x160xf32>, vector<2x160xf32> -> vector<2x160xf32>
    %190 = arith.addf %188, %189 : vector<2x160xf32>
    %191 = vector.extract_strided_slice %190 {offsets = [0, 0], sizes = [2, 32], strides = [1, 1]} : vector<2x160xf32> to vector<2x32xf32>
    %192 = arith.negf %191 : vector<2x32xf32>
    %193 = math.exp %192 : vector<2x32xf32>
    %cst_47 = arith.constant 1.000000e+00 : f32
    %194 = vector.broadcast %cst_47 : f32 to vector<2x32xf32>
    %195 = arith.addf %194, %193 : vector<2x32xf32>
    %196 = arith.divf %194, %195 : vector<2x32xf32>
    %197 = vector.extract_strided_slice %190 {offsets = [0, 32], sizes = [2, 32], strides = [1, 1]} : vector<2x160xf32> to vector<2x32xf32>
    %198 = arith.negf %197 : vector<2x32xf32>
    %199 = math.exp %198 : vector<2x32xf32>
    %cst_48 = arith.constant 1.000000e+00 : f32
    %200 = vector.broadcast %cst_48 : f32 to vector<2x32xf32>
    %201 = arith.addf %200, %199 : vector<2x32xf32>
    %202 = arith.divf %200, %201 : vector<2x32xf32>
    %203 = vector.extract_strided_slice %190 {offsets = [0, 64], sizes = [2, 32], strides = [1, 1]} : vector<2x160xf32> to vector<2x32xf32>
    %204 = math.tanh %203 : vector<2x32xf32>
    %205 = vector.extract_strided_slice %190 {offsets = [0, 96], sizes = [2, 32], strides = [1, 1]} : vector<2x160xf32> to vector<2x32xf32>
    %206 = arith.negf %205 : vector<2x32xf32>
    %207 = math.exp %206 : vector<2x32xf32>
    %cst_49 = arith.constant 1.000000e+00 : f32
    %208 = vector.broadcast %cst_49 : f32 to vector<2x32xf32>
    %209 = arith.addf %208, %207 : vector<2x32xf32>
    %210 = arith.divf %208, %209 : vector<2x32xf32>
    %211 = vector.extract_strided_slice %190 {offsets = [0, 128], sizes = [2, 32], strides = [1, 1]} : vector<2x160xf32> to vector<2x32xf32>
    %212 = arith.negf %211 : vector<2x32xf32>
    %213 = math.exp %212 : vector<2x32xf32>
    %cst_50 = arith.constant 1.000000e+00 : f32
    %214 = vector.broadcast %cst_50 : f32 to vector<2x32xf32>
    %215 = arith.addf %214, %213 : vector<2x32xf32>
    %216 = arith.divf %214, %215 : vector<2x32xf32>
    %217 = arith.mulf %202, %182 : vector<2x32xf32>
    %218 = arith.mulf %196, %204 : vector<2x32xf32>
    %219 = arith.addf %217, %218 : vector<2x32xf32>
    %220 = math.tanh %219 : vector<2x32xf32>
    %221 = arith.mulf %210, %220 : vector<2x32xf32>
    %222 = arith.mulf %216, %220 : vector<2x32xf32>
    %223 = tpu.concatenate %221, %222 in 1 : vector<2x32xf32>, vector<2x32xf32> -> vector<2x64xf32>
    %c10_51 = arith.constant 10 : index
    %c0_52 = arith.constant 0 : index
    %224 = vector.load %arg12[%c10_51, %c0_52] : memref<16x64xf32, #tpu.memory_space<vmem>>, vector<2x64xf32>
    tpu.vector_store %arg12[%c10_51, %c0_52], %223 {strides = array<i32>} : memref<16x64xf32, #tpu.memory_space<vmem>>, vector<2x64xf32>,
    %c12 = arith.constant 12 : index
    %c0_53 = arith.constant 0 : index
    %225 = vector.load %arg0[%c12, %c0_53] : memref<16x160xf32, #tpu.memory_space<vmem>>, vector<2x160xf32>
    %cst_54 = arith.constant dense<0.000000e+00> : vector<2x160xf32>
    %226 = tpu.matmul %221, %0, %cst_54 {dimension_numbers = #tpu.dot_dimension_numbers<[1], [0], [0], [1], [0, 0, 1, 1], [], []>} : vector<2x32xf32>, vector<32x160xf32>, vector<2x160xf32> -> vector<2x160xf32>
    %227 = arith.addf %225, %226 : vector<2x160xf32>
    %228 = vector.extract_strided_slice %227 {offsets = [0, 0], sizes = [2, 32], strides = [1, 1]} : vector<2x160xf32> to vector<2x32xf32>
    %229 = arith.negf %228 : vector<2x32xf32>
    %230 = math.exp %229 : vector<2x32xf32>
    %cst_55 = arith.constant 1.000000e+00 : f32
    %231 = vector.broadcast %cst_55 : f32 to vector<2x32xf32>
    %232 = arith.addf %231, %230 : vector<2x32xf32>
    %233 = arith.divf %231, %232 : vector<2x32xf32>
    %234 = vector.extract_strided_slice %227 {offsets = [0, 32], sizes = [2, 32], strides = [1, 1]} : vector<2x160xf32> to vector<2x32xf32>
    %235 = arith.negf %234 : vector<2x32xf32>
    %236 = math.exp %235 : vector<2x32xf32>
    %cst_56 = arith.constant 1.000000e+00 : f32
    %237 = vector.broadcast %cst_56 : f32 to vector<2x32xf32>
    %238 = arith.addf %237, %236 : vector<2x32xf32>
    %239 = arith.divf %237, %238 : vector<2x32xf32>
    %240 = vector.extract_strided_slice %227 {offsets = [0, 64], sizes = [2, 32], strides = [1, 1]} : vector<2x160xf32> to vector<2x32xf32>
    %241 = math.tanh %240 : vector<2x32xf32>
    %242 = vector.extract_strided_slice %227 {offsets = [0, 96], sizes = [2, 32], strides = [1, 1]} : vector<2x160xf32> to vector<2x32xf32>
    %243 = arith.negf %242 : vector<2x32xf32>
    %244 = math.exp %243 : vector<2x32xf32>
    %cst_57 = arith.constant 1.000000e+00 : f32
    %245 = vector.broadcast %cst_57 : f32 to vector<2x32xf32>
    %246 = arith.addf %245, %244 : vector<2x32xf32>
    %247 = arith.divf %245, %246 : vector<2x32xf32>
    %248 = vector.extract_strided_slice %227 {offsets = [0, 128], sizes = [2, 32], strides = [1, 1]} : vector<2x160xf32> to vector<2x32xf32>
    %249 = arith.negf %248 : vector<2x32xf32>
    %250 = math.exp %249 : vector<2x32xf32>
    %cst_58 = arith.constant 1.000000e+00 : f32
    %251 = vector.broadcast %cst_58 : f32 to vector<2x32xf32>
    %252 = arith.addf %251, %250 : vector<2x32xf32>
    %253 = arith.divf %251, %252 : vector<2x32xf32>
    %254 = arith.mulf %239, %219 : vector<2x32xf32>
    %255 = arith.mulf %233, %241 : vector<2x32xf32>
    %256 = arith.addf %254, %255 : vector<2x32xf32>
    %257 = math.tanh %256 : vector<2x32xf32>
    %258 = arith.mulf %247, %257 : vector<2x32xf32>
    %259 = arith.mulf %253, %257 : vector<2x32xf32>
    %260 = tpu.concatenate %258, %259 in 1 : vector<2x32xf32>, vector<2x32xf32> -> vector<2x64xf32>
    %c12_59 = arith.constant 12 : index
    %c0_60 = arith.constant 0 : index
    %261 = vector.load %arg12[%c12_59, %c0_60] : memref<16x64xf32, #tpu.memory_space<vmem>>, vector<2x64xf32>
    tpu.vector_store %arg12[%c12_59, %c0_60], %260 {strides = array<i32>} : memref<16x64xf32, #tpu.memory_space<vmem>>, vector<2x64xf32>,
    %c14 = arith.constant 14 : index
    %c0_61 = arith.constant 0 : index
    %262 = vector.load %arg0[%c14, %c0_61] : memref<16x160xf32, #tpu.memory_space<vmem>>, vector<2x160xf32>
    %cst_62 = arith.constant dense<0.000000e+00> : vector<2x160xf32>
    %263 = tpu.matmul %258, %0, %cst_62 {dimension_numbers = #tpu.dot_dimension_numbers<[1], [0], [0], [1], [0, 0, 1, 1], [], []>} : vector<2x32xf32>, vector<32x160xf32>, vector<2x160xf32> -> vector<2x160xf32>
    %264 = arith.addf %262, %263 : vector<2x160xf32>
    %265 = vector.extract_strided_slice %264 {offsets = [0, 0], sizes = [2, 32], strides = [1, 1]} : vector<2x160xf32> to vector<2x32xf32>
    %266 = arith.negf %265 : vector<2x32xf32>
    %267 = math.exp %266 : vector<2x32xf32>
    %cst_63 = arith.constant 1.000000e+00 : f32
    %268 = vector.broadcast %cst_63 : f32 to vector<2x32xf32>
    %269 = arith.addf %268, %267 : vector<2x32xf32>
    %270 = arith.divf %268, %269 : vector<2x32xf32>
    %271 = vector.extract_strided_slice %264 {offsets = [0, 32], sizes = [2, 32], strides = [1, 1]} : vector<2x160xf32> to vector<2x32xf32>
    %272 = arith.negf %271 : vector<2x32xf32>
    %273 = math.exp %272 : vector<2x32xf32>
    %cst_64 = arith.constant 1.000000e+00 : f32
    %274 = vector.broadcast %cst_64 : f32 to vector<2x32xf32>
    %275 = arith.addf %274, %273 : vector<2x32xf32>
    %276 = arith.divf %274, %275 : vector<2x32xf32>
    %277 = vector.extract_strided_slice %264 {offsets = [0, 64], sizes = [2, 32], strides = [1, 1]} : vector<2x160xf32> to vector<2x32xf32>
    %278 = math.tanh %277 : vector<2x32xf32>
    %279 = vector.extract_strided_slice %264 {offsets = [0, 96], sizes = [2, 32], strides = [1, 1]} : vector<2x160xf32> to vector<2x32xf32>
    %280 = arith.negf %279 : vector<2x32xf32>
    %281 = math.exp %280 : vector<2x32xf32>
    %cst_65 = arith.constant 1.000000e+00 : f32
    %282 = vector.broadcast %cst_65 : f32 to vector<2x32xf32>
    %283 = arith.addf %282, %281 : vector<2x32xf32>
    %284 = arith.divf %282, %283 : vector<2x32xf32>
    %285 = vector.extract_strided_slice %264 {offsets = [0, 128], sizes = [2, 32], strides = [1, 1]} : vector<2x160xf32> to vector<2x32xf32>
    %286 = arith.negf %285 : vector<2x32xf32>
    %287 = math.exp %286 : vector<2x32xf32>
    %cst_66 = arith.constant 1.000000e+00 : f32
    %288 = vector.broadcast %cst_66 : f32 to vector<2x32xf32>
    %289 = arith.addf %288, %287 : vector<2x32xf32>
    %290 = arith.divf %288, %289 : vector<2x32xf32>
    %291 = arith.mulf %276, %256 : vector<2x32xf32>
    %292 = arith.mulf %270, %278 : vector<2x32xf32>
    %293 = arith.addf %291, %292 : vector<2x32xf32>
    %294 = math.tanh %293 : vector<2x32xf32>
    %295 = arith.mulf %284, %294 : vector<2x32xf32>
    %296 = arith.mulf %290, %294 : vector<2x32xf32>
    %297 = tpu.concatenate %295, %296 in 1 : vector<2x32xf32>, vector<2x32xf32> -> vector<2x64xf32>
    %c14_67 = arith.constant 14 : index
    %c0_68 = arith.constant 0 : index
    %298 = vector.load %arg12[%c14_67, %c0_68] : memref<16x64xf32, #tpu.memory_space<vmem>>, vector<2x64xf32>
    tpu.vector_store %arg12[%c14_67, %c0_68], %297 {strides = array<i32>} : memref<16x64xf32, #tpu.memory_space<vmem>>, vector<2x64xf32>,
    %c0_69 = arith.constant 0 : index
    %c0_70 = arith.constant 0 : index
    %299 = vector.load %arg12[%c0_69, %c0_70] : memref<16x64xf32, #tpu.memory_space<vmem>>, vector<16x64xf32>
    %300 = vector.extract_strided_slice %299 {offsets = [0, 0], sizes = [16, 32], strides = [1, 1]} : vector<16x64xf32> to vector<16x32xf32>
    %301 = vector.extract_strided_slice %299 {offsets = [0, 32], sizes = [16, 32], strides = [1, 1]} : vector<16x64xf32> to vector<16x32xf32>
    %c0_71 = arith.constant 0 : index
    %c0_72 = arith.constant 0 : index
    %302 = vector.load %arg4[%c0_71, %c0_72] : memref<64x544xf32, #tpu.memory_space<vmem>>, vector<64x544xf32>
    %cst_73 = arith.constant dense<0.000000e+00> : vector<16x544xf32>
    %303 = tpu.matmul %299, %302, %cst_73 {dimension_numbers = #tpu.dot_dimension_numbers<[1], [0], [0], [1], [0, 0, 1, 1], [], []>} : vector<16x64xf32>, vector<64x544xf32>, vector<16x544xf32> -> vector<16x544xf32>
    %c0_74 = arith.constant 0 : index
    %c0_75 = arith.constant 0 : index
    %304 = vector.load %arg5[%c0_74, %c0_75] : memref<16x544xf32, #tpu.memory_space<vmem>>, vector<16x544xf32>
    %305 = arith.addf %303, %304 : vector<16x544xf32>
    %306 = math.tanh %305 : vector<16x544xf32>
    %c0_76 = arith.constant 0 : index
    %c0_77 = arith.constant 0 : index
    %307 = vector.load %arg6[%c0_76, %c0_77] : memref<544x17xf32, #tpu.memory_space<vmem>>, vector<544x17xf32>
    %cst_78 = arith.constant dense<0.000000e+00> : vector<16x17xf32>
    %308 = tpu.matmul %306, %307, %cst_78 {dimension_numbers = #tpu.dot_dimension_numbers<[1], [0], [0], [1], [0, 0, 1, 1], [], []>} : vector<16x544xf32>, vector<544x17xf32>, vector<16x17xf32> -> vector<16x17xf32>
    %cst_79 = arith.constant dense<0xFF800000> : vector<16xf32>
    %309 = vector.multi_reduction <maximumf>, %308, %cst_79 [1] : vector<16x17xf32> to vector<16xf32>
    %310 = vector.shape_cast %309 : vector<16xf32> to vector<16x1xf32>
    %311 = vector.broadcast %310 : vector<16x1xf32> to vector<16x17xf32>
    %312 = arith.subf %308, %311 : vector<16x17xf32>
    %313 = math.exp %312 : vector<16x17xf32>
    %cst_80 = arith.constant dense<0.000000e+00> : vector<16xf32>
    %314 = vector.multi_reduction <add>, %313, %cst_80 [1] : vector<16x17xf32> to vector<16xf32>
    %315 = vector.shape_cast %314 : vector<16xf32> to vector<16x1xf32>
    %316 = vector.broadcast %315 : vector<16x1xf32> to vector<16x17xf32>
    %317 = arith.divf %313, %316 : vector<16x17xf32>
    %318 = vector.extract_strided_slice %317 {offsets = [0, 0], sizes = [16, 16], strides = [1, 1]} : vector<16x17xf32> to vector<16x16xf32>
    %319 = vector.extract_strided_slice %317 {offsets = [0, 16], sizes = [16, 1], strides = [1, 1]} : vector<16x17xf32> to vector<16x1xf32>
    %320 = tpu.concatenate %318, %318 in 1 : vector<16x16xf32>, vector<16x16xf32> -> vector<16x32xf32>
    %c0_81 = arith.constant 0 : index
    %c0_82 = arith.constant 0 : index
    %321 = vector.load %arg7[%c0_81, %c0_82] : memref<16x32xf32, #tpu.memory_space<vmem>>, vector<16x32xf32>
    %322 = arith.mulf %320, %321 : vector<16x32xf32>
    %c0_83 = arith.constant 0 : index
    %c0_84 = arith.constant 0 : index
    %323 = vector.load %arg8[%c0_83, %c0_84] : memref<32x32xf32, #tpu.memory_space<vmem>>, vector<32x32xf32>
    %cst_85 = arith.constant dense<0.000000e+00> : vector<16x32xf32>
    %324 = tpu.matmul %322, %323, %cst_85 {dimension_numbers = #tpu.dot_dimension_numbers<[1], [0], [0], [1], [0, 0, 1, 1], [], []>} : vector<16x32xf32>, vector<32x32xf32>, vector<16x32xf32> -> vector<16x32xf32>
    %325 = vector.broadcast %319 : vector<16x1xf32> to vector<16x32xf32>
    %326 = arith.mulf %301, %325 : vector<16x32xf32>
    %327 = arith.addf %324, %326 : vector<16x32xf32>
    %328 = arith.addf %300, %327 : vector<16x32xf32>
    %c0_86 = arith.constant 0 : index
    %c0_87 = arith.constant 0 : index
    %329 = vector.load %arg9[%c0_86, %c0_87] : memref<32x128xf32, #tpu.memory_space<vmem>>, vector<32x128xf32>
    %cst_88 = arith.constant dense<0.000000e+00> : vector<16x128xf32>
    %330 = tpu.matmul %328, %329, %cst_88 {dimension_numbers = #tpu.dot_dimension_numbers<[1], [0], [0], [1], [0, 0, 1, 1], [], []>} : vector<16x32xf32>, vector<32x128xf32>, vector<16x128xf32> -> vector<16x128xf32>
    %c0_89 = arith.constant 0 : index
    %c0_90 = arith.constant 0 : index
    %331 = vector.load %arg10[%c0_89, %c0_90] : memref<1x128xf32, #tpu.memory_space<vmem>>, vector<1x128xf32>
    %332 = vector.broadcast %331 : vector<1x128xf32> to vector<16x128xf32>
    %333 = arith.addf %330, %332 : vector<16x128xf32>
    %c0_91 = arith.constant 0 : index
    %c0_92 = arith.constant 0 : index
    %334 = vector.load %arg11[%c0_91, %c0_92] : memref<16x128xf32, #tpu.memory_space<vmem>>, vector<16x128xf32>
    tpu.vector_store %arg11[%c0_91, %c0_92], %333 {strides = array<i32>} : memref<16x128xf32, #tpu.memory_space<vmem>>, vector<16x128xf32>,
    return
  }
}

</mosaic_0001>

<llo_original>
// kernel: tpu_custom_call.1
$region0: #{tpu_custom_call.1}
  #allocation0 [shape = 'u32[]', space=smem, size = 0x4, offset = 0x4, fixed_abs, tag = 'smem constant byte address 0x4 - core index']
  #allocation1 [shape = 'u32[144,128]{1,0:T(1,128)}', space=vmem, size = 0x12000, scoped, tag = 'internal scratch']
  #allocation2 [shape = 'f32[16,64]{1,0:T(8,128)}', space=vmem, size = 0x2000, scoped, tag = 'scratch operand']
  %s0 = inlined_call_operand.vmem [shape: f32[16,160], index: 0, kind: input, shape index: {}]
  %s1 = inlined_call_operand.vmem [shape: f32[2,32], index: 1, kind: input, shape index: {}]
  %s2 = inlined_call_operand.vmem [shape: f32[2,32], index: 2, kind: input, shape index: {}]
  %s3 = inlined_call_operand.vmem [shape: f32[32,160], index: 3, kind: input, shape index: {}]
  %s4 = inlined_call_operand.vmem [shape: f32[64,544], index: 4, kind: input, shape index: {}]
  %s5 = inlined_call_operand.vmem [shape: f32[16,544], index: 5, kind: input, shape index: {}]
  %s6 = inlined_call_operand.vmem [shape: f32[544,17], index: 6, kind: input, shape index: {}]
  %s7 = inlined_call_operand.vmem [shape: f32[16,32], index: 7, kind: input, shape index: {}]
  %s8 = inlined_call_operand.vmem [shape: f32[32,32], index: 8, kind: input, shape index: {}]
  %s9 = inlined_call_operand.vmem [shape: f32[32,128], index: 9, kind: input, shape index: {}]
  %s10 = inlined_call_operand.vmem [shape: f32[1,128], index: 10, kind: input, shape index: {}]
  %s11 = inlined_call_operand.hbm [shape: f32[16,128], index: 11, kind: output, shape index: {}]
  %s12 = sld [smem:[#allocation0]]
  $region54: #{tpu_custom_call.1} parent=0
    _
  %s14 = ssub.s32 1, %s12
  %s15 = scalar_select 0, %s14, %s12
  $region1: #{tpu_custom_call.1} parent=0
    #allocation3 [shape = 'u8[8192]{0}', space=vmem, size = 0x2000, scoped, tag = 'output window, operand 0, single buffered']
    #allocation4 [shape = 's32[1]{0}', space=sflag, size = 0x4, scoped, tag = 'scoped memory for tpu_custom_call.1']
    %16 = vsyncpa [#allocation4], 0
    // Predicated region
    $region2: #{tpu_custom_call.1} parent=1 // pred_check
      _
    $region3: #{tpu_custom_call.1} parent=1 // pred_check_branch
      %18 = sbr.rel (0) target = $region5
    $region4: #{tpu_custom_call.1} parent=1 // pred_region
      _
    $region5: #{tpu_custom_call.1} parent=1 // pred_fallthru
      _
    // Predicated region
    $region6: #{tpu_custom_call.1} parent=1 // pred_check
      _
    $region7: #{tpu_custom_call.1} parent=1 // pred_check_branch
      %20 = sbr.rel (0) target = $region9
    $region8: #{tpu_custom_call.1} parent=1 // pred_region
      _
    $region9: #{tpu_custom_call.1} parent=1 // pred_fallthru
      _
    // Predicated region
    $region10: #{tpu_custom_call.1} parent=1 // pred_check
      _
    $region11: #{tpu_custom_call.1} parent=1 // pred_check_branch
      %22 = sbr.rel (0) target = $region13
    $region12: #{tpu_custom_call.1} parent=1 // pred_region
      _
    $region13: #{tpu_custom_call.1} parent=1 // pred_fallthru
      _
    // Predicated region
    $region14: #{tpu_custom_call.1} parent=1 // pred_check
      _
    $region15: #{tpu_custom_call.1} parent=1 // pred_check_branch
      %24 = sbr.rel (0) target = $region17
    $region16: #{tpu_custom_call.1} parent=1 // pred_region
      _
    $region17: #{tpu_custom_call.1} parent=1 // pred_fallthru
      _
    // Predicated region
    $region18: #{tpu_custom_call.1} parent=1 // pred_check
      _
    $region19: #{tpu_custom_call.1} parent=1 // pred_check_branch
      %26 = sbr.rel (0) target = $region21
    $region20: #{tpu_custom_call.1} parent=1 // pred_region
      _
    $region21: #{tpu_custom_call.1} parent=1 // pred_fallthru
      _
    // Predicated region
    $region22: #{tpu_custom_call.1} parent=1 // pred_check
      _
    $region23: #{tpu_custom_call.1} parent=1 // pred_check_branch
      %28 = sbr.rel (0) target = $region25
    $region24: #{tpu_custom_call.1} parent=1 // pred_region
      _
    $region25: #{tpu_custom_call.1} parent=1 // pred_fallthru
      _
    // Predicated region
    $region26: #{tpu_custom_call.1} parent=1 // pred_check
      _
    $region27: #{tpu_custom_call.1} parent=1 // pred_check_branch
      %30 = sbr.rel (0) target = $region29
    $region28: #{tpu_custom_call.1} parent=1 // pred_region
      _
    $region29: #{tpu_custom_call.1} parent=1 // pred_fallthru
      _
    // Predicated region
    $region30: #{tpu_custom_call.1} parent=1 // pred_check
      _
    $region31: #{tpu_custom_call.1} parent=1 // pred_check_branch
      %32 = sbr.rel (0) target = $region33
    $region32: #{tpu_custom_call.1} parent=1 // pred_region
      _
    $region33: #{tpu_custom_call.1} parent=1 // pred_fallthru
      _
    // Predicated region
    $region34: #{tpu_custom_call.1} parent=1 // pred_check
      _
    $region35: #{tpu_custom_call.1} parent=1 // pred_check_branch
      %34 = sbr.rel (0) target = $region37
    $region36: #{tpu_custom_call.1} parent=1 // pred_region
      _
    $region37: #{tpu_custom_call.1} parent=1 // pred_fallthru
      _
    // Predicated region
    $region38: #{tpu_custom_call.1} parent=1 // pred_check
      _
    $region39: #{tpu_custom_call.1} parent=1 // pred_check_branch
      %36 = sbr.rel (0) target = $region41
    $region40: #{tpu_custom_call.1} parent=1 // pred_region
      _
    $region41: #{tpu_custom_call.1} parent=1 // pred_fallthru
      _
    // Predicated region
    $region42: #{tpu_custom_call.1} parent=1 // pred_check
      _
    $region43: #{tpu_custom_call.1} parent=1 // pred_check_branch
      %38 = sbr.rel (0) target = $region45
    $region44: #{tpu_custom_call.1} parent=1 // pred_region
      _
    $region45: #{tpu_custom_call.1} parent=1 // pred_fallthru
      _
    %v39 = vld [vmem:[%s3] sm:$0xff]
    %v40 = vld [vmem:[%s3 + $0x8] sm:$0xff]
    %v41 = vld [vmem:[%s3 + $0x10] sm:$0xff]
    %v42 = vld [vmem:[%s3 + $0x18] sm:$0xff]
    %v43 = vld [vmem:[%s3 + $0x20] sm:$0xff]
    %v44 = vld [vmem:[%s3 + $0x28] sm:$0xff]
    %v45 = vld [vmem:[%s3 + $0x30] sm:$0xff]
    %v46 = vld [vmem:[%s3 + $0x38] sm:$0xff]
    %v47 = vld [vmem:[%s1] sm:$0x3]
    %v48 = vld [vmem:[%s2] sm:$0x3]
    %v49 = vld [vmem:[%s0] sm:$0x3]
    %v50 = vld [vmem:[%s0 + $0x8] sm:$0x3]
    %vm51 = vcmask 261120
    %v53 = vsel %vm51, %v47, 0
    %55 = vmatprep.subr.mxu0 0.0
    %56 = vmatpush1.msra.mxu0 0.0
    %57 = vmatprep.subr.mxu0 0.0
    %58 = vmatpush1.msra.mxu0 0.0
    %59 = vmatprep.subr.mxu0 0.0
    %60 = vmatpush1.msra.mxu0 0.0
    %61 = vmatprep.subr.mxu0 0.0
    %62 = vmatpush1.msra.mxu0 0.0
    %63 = vmatprep.subr.mxu0 0.0
    %64 = vmatpush1.msra.mxu0 0.0
    %65 = vmatprep.subr.mxu0 0.0
    %66 = vmatpush1.msra.mxu0 0.0
    %67 = vmatprep.subr.mxu0 0.0
    %68 = vmatpush1.msra.mxu0 0.0
    %69 = vmatprep.subr.mxu0 0.0
    %70 = vmatpush1.msra.mxu0 0.0
    %71 = vmatprep.subr.mxu0 0.0
    %72 = vmatpush1.msra.mxu0 0.0
    %73 = vmatprep.subr.mxu0 0.0
    %74 = vmatpush1.msra.mxu0 0.0
    %75 = vmatprep.subr.mxu0 0.0
    %76 = vmatpush1.msra.mxu0 0.0
    %77 = vmatprep.subr.mxu0 0.0
    %78 = vmatpush1.msra.mxu0 0.0
    %79 = vmatprep.subr.mxu0 %v46
    %80 = vmatpush1.msra.mxu0 %v45
    %81 = vmatprep.subr.mxu0 %v44
    %82 = vmatpush1.msra.mxu0 %v43
    %83 = vmatprep.subr.mxu0 %v42
    %84 = vmatpush1.msra.mxu0 %v41
    %85 = vmatprep.subr.mxu0 %v40
    %86 = vmatpush1.msra.mxu0 %v39
    %87 = vmatprep.subr.mxu0 0.0
    %88 = vmatpush2.msra.mxu0 0.0
    %89 = vmatprep.subr.mxu0 0.0
    %90 = vmatpush2.msra.mxu0 0.0
    %91 = vmatprep.subr.mxu0 0.0
    %92 = vmatpush2.msra.mxu0 0.0
    %93 = vmatprep.subr.mxu0 0.0
    %94 = vmatpush2.msra.mxu0 0.0
    %95 = vmatprep.subr.mxu0 0.0
    %96 = vmatpush2.msra.mxu0 0.0
    %97 = vmatprep.subr.mxu0 0.0
    %98 = vmatpush2.msra.mxu0 0.0
    %99 = vmatprep.subr.mxu0 0.0
    %100 = vmatpush2.msra.mxu0 0.0
    %101 = vmatprep.subr.mxu0 0.0
    %102 = vmatpush2.msra.mxu0 0.0
    %103 = vmatprep.subr.mxu0 0.0
    %104 = vmatpush2.msra.mxu0 0.0
    %105 = vmatprep.subr.mxu0 0.0
    %106 = vmatpush2.msra.mxu0 0.0
    %107 = vmatprep.subr.mxu0 0.0
    %108 = vmatpush2.msra.mxu0 0.0
    %109 = vmatprep.subr.mxu0 0.0
    %110 = vmatpush2.msra.mxu0 0.0
    %111 = vmatprep.subr.mxu0 0.0
    %112 = vmatpush2.msra.mxu0 0.0
    %113 = vmatprep.subr.mxu0 0.0
    %114 = vmatpush2.msra.mxu0 0.0
    %115 = vmatprep.subr.mxu0 0.0
    %116 = vmatpush2.msra.mxu0 0.0
    %117 = vmatprep.subr.mxu0 0.0
    %118 = vmatpush2.msra.mxu0 0.0
    %119 = vmatprep.mubr.f32.mxu0 0.0
    %120 = vmatmul.mubr.f32.gmra.mxu0 %v53
    %v121 = vpop.f32.mrf.mxu0
    %v122 = vadd.f32 0.0, %v121
    %v123 = vpop.f32.mrf.mxu0
    %v124 = vadd.f32 0.0, %v123
    %125 = vdwg.mxu0
    %v126 = vadd.f32 %v49, %v122
    %v127 = vadd.f32 %v50, %v124
    %v128 = vxor.u32 %v126, 2147483648
    %v129 = vmul.f32 %v128, 1.442695
    %v130 = vpow.pop %v129
    %v131 = vadd.f32 %v130, 1.0
    %v132 = vrcp.pop %v131
    %v133 = vmul.f32 1.0, %v132
    %v134 = vtanh.pop %v126
    %v135 = vxor.u32 %v127, 2147483648
    %v136 = vmul.f32 %v135, 1.442695
    %v137 = vpow.pop %v136
    %v138 = vadd.f32 %v137, 1.0
    %v139 = vrcp.pop %v138
    %v140 = vmul.f32 1.0, %v139
    %142 = vrot.lane.b32.xlu0 %v48, 32
    %v143 = vpop.permute.xlu0 %142
    %v145 = vmul.f32 %v133, %v143
    %147 = vrot.lane.b32.xlu0 %v134, 64
    %v148 = vpop.permute.xlu0 %147
    %v150 = vmul.f32 %v133, %v148
    %152 = vrot.lane.b32.xlu0 %v150, 32
    %v153 = vpop.permute.xlu0 %152
    %v155 = vadd.f32 %v145, %v153
    %v156 = vtanh.pop %v155
    %158 = vrot.lane.b32.xlu0 %v156, 64
    %v159 = vpop.permute.xlu0 %158
    %v161 = vmul.f32 %v133, %v159
    %162 = vrot.lane.b32.xlu0 %v156, 96
    %v163 = vpop.permute.xlu0 %162
    %v165 = vmul.f32 %v140, %v163
    %167 = vrot.lane.b32.xlu0 %v161, 32
    %v168 = vpop.permute.xlu0 %167
    %171 = vrot.lane.b32.xlu0 %v165, 32
    %v172 = vpop.permute.xlu0 %171
    %v174 = vsel %vm51, %v168, %v172
    %vm175 = vcmask 517120
    %176 = vst.msk [vmem:[#allocation2] sm:$0x3] %vm175, %v174
    %v177 = vld [vmem:[%s0] sm:$0xc]
    %v178 = vld [vmem:[%s0 + $0x8] sm:$0xc]
    %v179 = vsel %vm51, %v168, 0
    %181 = vmatprep.subr.mxu0 0.0
    %182 = vmatpush1.msra.mxu0 0.0
    %183 = vmatprep.subr.mxu0 0.0
    %184 = vmatpush1.msra.mxu0 0.0
    %185 = vmatprep.subr.mxu0 0.0
    %186 = vmatpush1.msra.mxu0 0.0
    %187 = vmatprep.subr.mxu0 0.0
    %188 = vmatpush1.msra.mxu0 0.0
    %189 = vmatprep.subr.mxu0 0.0
    %190 = vmatpush1.msra.mxu0 0.0
    %191 = vmatprep.subr.mxu0 0.0
    %192 = vmatpush1.msra.mxu0 0.0
    %193 = vmatprep.subr.mxu0 0.0
    %194 = vmatpush1.msra.mxu0 0.0
    %195 = vmatprep.subr.mxu0 0.0
    %196 = vmatpush1.msra.mxu0 0.0
    %197 = vmatprep.subr.mxu0 0.0
    %198 = vmatpush1.msra.mxu0 0.0
    %199 = vmatprep.subr.mxu0 0.0
    %200 = vmatpush1.msra.mxu0 0.0
    %201 = vmatprep.subr.mxu0 0.0
    %202 = vmatpush1.msra.mxu0 0.0
    %203 = vmatprep.subr.mxu0 0.0
    %204 = vmatpush1.msra.mxu0 0.0
    %205 = vmatprep.subr.mxu0 %v46
    %206 = vmatpush1.msra.mxu0 %v45
    %207 = vmatprep.subr.mxu0 %v44
    %208 = vmatpush1.msra.mxu0 %v43
    %209 = vmatprep.subr.mxu0 %v42
    %210 = vmatpush1.msra.mxu0 %v41
    %211 = vmatprep.subr.mxu0 %v40
    %212 = vmatpush1.msra.mxu0 %v39
    %213 = vmatprep.subr.mxu0 0.0
    %214 = vmatpush2.msra.mxu0 0.0
    %215 = vmatprep.subr.mxu0 0.0
    %216 = vmatpush2.msra.mxu0 0.0
    %217 = vmatprep.subr.mxu0 0.0
    %218 = vmatpush2.msra.mxu0 0.0
    %219 = vmatprep.subr.mxu0 0.0
    %220 = vmatpush2.msra.mxu0 0.0
    %221 = vmatprep.subr.mxu0 0.0
    %222 = vmatpush2.msra.mxu0 0.0
    %223 = vmatprep.subr.mxu0 0.0
    %224 = vmatpush2.msra.mxu0 0.0
    %225 = vmatprep.subr.mxu0 0.0
    %226 = vmatpush2.msra.mxu0 0.0
    %227 = vmatprep.subr.mxu0 0.0
    %228 = vmatpush2.msra.mxu0 0.0
    %229 = vmatprep.subr.mxu0 0.0
    %230 = vmatpush2.msra.mxu0 0.0
    %231 = vmatprep.subr.mxu0 0.0
    %232 = vmatpush2.msra.mxu0 0.0
    %233 = vmatprep.subr.mxu0 0.0
    %234 = vmatpush2.msra.mxu0 0.0
    %235 = vmatprep.subr.mxu0 0.0
    %236 = vmatpush2.msra.mxu0 0.0
    %237 = vmatprep.subr.mxu0 0.0
    %238 = vmatpush2.msra.mxu0 0.0
    %239 = vmatprep.subr.mxu0 0.0
    %240 = vmatpush2.msra.mxu0 0.0
    %241 = vmatprep.subr.mxu0 0.0
    %242 = vmatpush2.msra.mxu0 0.0
    %243 = vmatprep.subr.mxu0 0.0
    %244 = vmatpush2.msra.mxu0 0.0
    %245 = vmatprep.mubr.f32.mxu0 0.0
    %246 = vmatmul.mubr.f32.gmra.mxu0 %v179
    %v247 = vpop.f32.mrf.mxu0
    %v248 = vadd.f32 0.0, %v247
    %v249 = vpop.f32.mrf.mxu0
    %v250 = vadd.f32 0.0, %v249
    %251 = vdwg.mxu0
    %v254 = vrot.slane %v248, 6
    %v255 = vrot.slane %v250, 6
    %v258 = vadd.f32 %v177, %v254
    %v259 = vadd.f32 %v178, %v255
    %v260 = vxor.u32 %v258, 2147483648
    %v261 = vmul.f32 %v260, 1.442695
    %v262 = vpow.pop %v261
    %v263 = vadd.f32 %v262, 1.0
    %v264 = vrcp.pop %v263
    %v265 = vmul.f32 1.0, %v264
    %v266 = vtanh.pop %v258
    %v267 = vxor.u32 %v259, 2147483648
    %v268 = vmul.f32 %v267, 1.442695
    %v269 = vpow.pop %v268
    %v270 = vadd.f32 %v269, 1.0
    %v271 = vrcp.pop %v270
    %v272 = vmul.f32 1.0, %v271
    %v274 = vrot.slane %v155, 6
    %v276 = vmul.f32 %v265, %v274
    %278 = vrot.lane.b32.xlu0 %v266, 64
    %v279 = vpop.permute.xlu0 %278
    %v281 = vmul.f32 %v265, %v279
    %283 = vrot.lane.b32.xlu0 %v281, 32
    %v284 = vpop.permute.xlu0 %283
    %v286 = vadd.f32 %v276, %v284
    %v287 = vtanh.pop %v286
    %289 = vrot.lane.b32.xlu0 %v287, 64
    %v290 = vpop.permute.xlu0 %289
    %v292 = vmul.f32 %v265, %v290
    %293 = vrot.lane.b32.xlu0 %v287, 96
    %v294 = vpop.permute.xlu0 %293
    %v296 = vmul.f32 %v272, %v294
    %298 = vrot.lane.b32.xlu0 %v292, 32
    %v299 = vpop.permute.xlu0 %298
    %302 = vrot.lane.b32.xlu0 %v296, 32
    %v303 = vpop.permute.xlu0 %302
    %v305 = vsel %vm51, %v299, %v303
    %vm306 = vcmask 519170
    %307 = vst.msk [vmem:[#allocation2] sm:$0xc] %vm306, %v305
    %v308 = vld [vmem:[%s0] sm:$0x30]
    %v309 = vld [vmem:[%s0 + $0x8] sm:$0x30]
    %v310 = vrot.slane %v292, 2
    %311 = vrot.lane.b32.xlu0 %v310, 32
    %v312 = vpop.permute.xlu0 %311
    %v313 = vsel %vm51, %v312, 0
    %315 = vmatprep.subr.mxu0 0.0
    %316 = vmatpush1.msra.mxu0 0.0
    %317 = vmatprep.subr.mxu0 0.0
    %318 = vmatpush1.msra.mxu0 0.0
    %319 = vmatprep.subr.mxu0 0.0
    %320 = vmatpush1.msra.mxu0 0.0
    %321 = vmatprep.subr.mxu0 0.0
    %322 = vmatpush1.msra.mxu0 0.0
    %323 = vmatprep.subr.mxu0 0.0
    %324 = vmatpush1.msra.mxu0 0.0
    %325 = vmatprep.subr.mxu0 0.0
    %326 = vmatpush1.msra.mxu0 0.0
    %327 = vmatprep.subr.mxu0 0.0
    %328 = vmatpush1.msra.mxu0 0.0
    %329 = vmatprep.subr.mxu0 0.0
    %330 = vmatpush1.msra.mxu0 0.0
    %331 = vmatprep.subr.mxu0 0.0
    %332 = vmatpush1.msra.mxu0 0.0
    %333 = vmatprep.subr.mxu0 0.0
    %334 = vmatpush1.msra.mxu0 0.0
    %335 = vmatprep.subr.mxu0 0.0
    %336 = vmatpush1.msra.mxu0 0.0
    %337 = vmatprep.subr.mxu0 0.0
    %338 = vmatpush1.msra.mxu0 0.0
    %339 = vmatprep.subr.mxu0 %v46
    %340 = vmatpush1.msra.mxu0 %v45
    %341 = vmatprep.subr.mxu0 %v44
    %342 = vmatpush1.msra.mxu0 %v43
    %343 = vmatprep.subr.mxu0 %v42
    %344 = vmatpush1.msra.mxu0 %v41
    %345 = vmatprep.subr.mxu0 %v40
    %346 = vmatpush1.msra.mxu0 %v39
    %347 = vmatprep.subr.mxu0 0.0
    %348 = vmatpush2.msra.mxu0 0.0
    %349 = vmatprep.subr.mxu0 0.0
    %350 = vmatpush2.msra.mxu0 0.0
    %351 = vmatprep.subr.mxu0 0.0
    %352 = vmatpush2.msra.mxu0 0.0
    %353 = vmatprep.subr.mxu0 0.0
    %354 = vmatpush2.msra.mxu0 0.0
    %355 = vmatprep.subr.mxu0 0.0
    %356 = vmatpush2.msra.mxu0 0.0
    %357 = vmatprep.subr.mxu0 0.0
    %358 = vmatpush2.msra.mxu0 0.0
    %359 = vmatprep.subr.mxu0 0.0
    %360 = vmatpush2.msra.mxu0 0.0
    %361 = vmatprep.subr.mxu0 0.0
    %362 = vmatpush2.msra.mxu0 0.0
    %363 = vmatprep.subr.mxu0 0.0
    %364 = vmatpush2.msra.mxu0 0.0
    %365 = vmatprep.subr.mxu0 0.0
    %366 = vmatpush2.msra.mxu0 0.0
    %367 = vmatprep.subr.mxu0 0.0
    %368 = vmatpush2.msra.mxu0 0.0
    %369 = vmatprep.subr.mxu0 0.0
    %370 = vmatpush2.msra.mxu0 0.0
    %371 = vmatprep.subr.mxu0 0.0
    %372 = vmatpush2.msra.mxu0 0.0
    %373 = vmatprep.subr.mxu0 0.0
    %374 = vmatpush2.msra.mxu0 0.0
    %375 = vmatprep.subr.mxu0 0.0
    %376 = vmatpush2.msra.mxu0 0.0
    %377 = vmatprep.subr.mxu0 0.0
    %378 = vmatpush2.msra.mxu0 0.0
    %379 = vmatprep.mubr.f32.mxu0 0.0
    %380 = vmatmul.mubr.f32.gmra.mxu0 %v313
    %v381 = vpop.f32.mrf.mxu0
    %v382 = vadd.f32 0.0, %v381
    %v383 = vpop.f32.mrf.mxu0
    %v384 = vadd.f32 0.0, %v383
    %385 = vdwg.mxu0
    %v388 = vrot.slane %v382, 4
    %v389 = vrot.slane %v384, 4
    %v392 = vadd.f32 %v308, %v388
    %v393 = vadd.f32 %v309, %v389
    %v394 = vxor.u32 %v392, 2147483648
    %v395 = vmul.f32 %v394, 1.442695
    %v396 = vpow.pop %v395
    %v397 = vadd.f32 %v396, 1.0
    %v398 = vrcp.pop %v397
    %v399 = vmul.f32 1.0, %v398
    %v400 = vtanh.pop %v392
    %v401 = vxor.u32 %v393, 2147483648
    %v402 = vmul.f32 %v401, 1.442695
    %v403 = vpow.pop %v402
    %v404 = vadd.f32 %v403, 1.0
    %v405 = vrcp.pop %v404
    %v406 = vmul.f32 1.0, %v405
    %v408 = vrot.slane %v286, 6
    %v410 = vmul.f32 %v399, %v408
    %412 = vrot.lane.b32.xlu0 %v400, 64
    %v413 = vpop.permute.xlu0 %412
    %v415 = vmul.f32 %v399, %v413
    %417 = vrot.lane.b32.xlu0 %v415, 32
    %v418 = vpop.permute.xlu0 %417
    %v420 = vadd.f32 %v410, %v418
    %v421 = vtanh.pop %v420
    %423 = vrot.lane.b32.xlu0 %v421, 64
    %v424 = vpop.permute.xlu0 %423
    %v426 = vmul.f32 %v399, %v424
    %427 = vrot.lane.b32.xlu0 %v421, 96
    %v428 = vpop.permute.xlu0 %427
    %v430 = vmul.f32 %v406, %v428
    %432 = vrot.lane.b32.xlu0 %v426, 32
    %v433 = vpop.permute.xlu0 %432
    %436 = vrot.lane.b32.xlu0 %v430, 32
    %v437 = vpop.permute.xlu0 %436
    %v439 = vsel %vm51, %v433, %v437
    %vm440 = vcmask 521220
    %441 = vst.msk [vmem:[#allocation2] sm:$0x30] %vm440, %v439
    %v442 = vld [vmem:[%s0] sm:$0xc0]
    %v443 = vld [vmem:[%s0 + $0x8] sm:$0xc0]
    %v444 = vrot.slane %v426, 4
    %445 = vrot.lane.b32.xlu0 %v444, 32
    %v446 = vpop.permute.xlu0 %445
    %v447 = vsel %vm51, %v446, 0
    %449 = vmatprep.subr.mxu0 0.0
    %450 = vmatpush1.msra.mxu0 0.0
    %451 = vmatprep.subr.mxu0 0.0
    %452 = vmatpush1.msra.mxu0 0.0
    %453 = vmatprep.subr.mxu0 0.0
    %454 = vmatpush1.msra.mxu0 0.0
    %455 = vmatprep.subr.mxu0 0.0
    %456 = vmatpush1.msra.mxu0 0.0
    %457 = vmatprep.subr.mxu0 0.0
    %458 = vmatpush1.msra.mxu0 0.0
    %459 = vmatprep.subr.mxu0 0.0
    %460 = vmatpush1.msra.mxu0 0.0
    %461 = vmatprep.subr.mxu0 0.0
    %462 = vmatpush1.msra.mxu0 0.0
    %463 = vmatprep.subr.mxu0 0.0
    %464 = vmatpush1.msra.mxu0 0.0
    %465 = vmatprep.subr.mxu0 0.0
    %466 = vmatpush1.msra.mxu0 0.0
    %467 = vmatprep.subr.mxu0 0.0
    %468 = vmatpush1.msra.mxu0 0.0
    %469 = vmatprep.subr.mxu0 0.0
    %470 = vmatpush1.msra.mxu0 0.0
    %471 = vmatprep.subr.mxu0 0.0
    %472 = vmatpush1.msra.mxu0 0.0
    %473 = vmatprep.subr.mxu0 %v46
    %474 = vmatpush1.msra.mxu0 %v45
    %475 = vmatprep.subr.mxu0 %v44
    %476 = vmatpush1.msra.mxu0 %v43
    %477 = vmatprep.subr.mxu0 %v42
    %478 = vmatpush1.msra.mxu0 %v41
    %479 = vmatprep.subr.mxu0 %v40
    %480 = vmatpush1.msra.mxu0 %v39
    %481 = vmatprep.subr.mxu0 0.0
    %482 = vmatpush2.msra.mxu0 0.0
    %483 = vmatprep.subr.mxu0 0.0
    %484 = vmatpush2.msra.mxu0 0.0
    %485 = vmatprep.subr.mxu0 0.0
    %486 = vmatpush2.msra.mxu0 0.0
    %487 = vmatprep.subr.mxu0 0.0
    %488 = vmatpush2.msra.mxu0 0.0
    %489 = vmatprep.subr.mxu0 0.0
    %490 = vmatpush2.msra.mxu0 0.0
    %491 = vmatprep.subr.mxu0 0.0
    %492 = vmatpush2.msra.mxu0 0.0
    %493 = vmatprep.subr.mxu0 0.0
    %494 = vmatpush2.msra.mxu0 0.0
    %495 = vmatprep.subr.mxu0 0.0
    %496 = vmatpush2.msra.mxu0 0.0
    %497 = vmatprep.subr.mxu0 0.0
    %498 = vmatpush2.msra.mxu0 0.0
    %499 = vmatprep.subr.mxu0 0.0
    %500 = vmatpush2.msra.mxu0 0.0
    %501 = vmatprep.subr.mxu0 0.0
    %502 = vmatpush2.msra.mxu0 0.0
    %503 = vmatprep.subr.mxu0 0.0
    %504 = vmatpush2.msra.mxu0 0.0
    %505 = vmatprep.subr.mxu0 0.0
    %506 = vmatpush2.msra.mxu0 0.0
    %507 = vmatprep.subr.mxu0 0.0
    %508 = vmatpush2.msra.mxu0 0.0
    %509 = vmatprep.subr.mxu0 0.0
    %510 = vmatpush2.msra.mxu0 0.0
    %511 = vmatprep.subr.mxu0 0.0
    %512 = vmatpush2.msra.mxu0 0.0
    %513 = vmatprep.mubr.f32.mxu0 0.0
    %514 = vmatmul.mubr.f32.gmra.mxu0 %v447
    %v515 = vpop.f32.mrf.mxu0
    %v516 = vadd.f32 0.0, %v515
    %v517 = vpop.f32.mrf.mxu0
    %v518 = vadd.f32 0.0, %v517
    %519 = vdwg.mxu0
    %v522 = vrot.slane %v516, 2
    %v523 = vrot.slane %v518, 2
    %v526 = vadd.f32 %v442, %v522
    %v527 = vadd.f32 %v443, %v523
    %v528 = vxor.u32 %v526, 2147483648
    %v529 = vmul.f32 %v528, 1.442695
    %v530 = vpow.pop %v529
    %v531 = vadd.f32 %v530, 1.0
    %v532 = vrcp.pop %v531
    %v533 = vmul.f32 1.0, %v532
    %v534 = vtanh.pop %v526
    %v535 = vxor.u32 %v527, 2147483648
    %v536 = vmul.f32 %v535, 1.442695
    %v537 = vpow.pop %v536
    %v538 = vadd.f32 %v537, 1.0
    %v539 = vrcp.pop %v538
    %v540 = vmul.f32 1.0, %v539
    %v542 = vrot.slane %v420, 6
    %v544 = vmul.f32 %v533, %v542
    %546 = vrot.lane.b32.xlu0 %v534, 64
    %v547 = vpop.permute.xlu0 %546
    %v549 = vmul.f32 %v533, %v547
    %551 = vrot.lane.b32.xlu0 %v549, 32
    %v552 = vpop.permute.xlu0 %551
    %v554 = vadd.f32 %v544, %v552
    %v555 = vtanh.pop %v554
    %557 = vrot.lane.b32.xlu0 %v555, 64
    %v558 = vpop.permute.xlu0 %557
    %v560 = vmul.f32 %v533, %v558
    %561 = vrot.lane.b32.xlu0 %v555, 96
    %v562 = vpop.permute.xlu0 %561
    %v564 = vmul.f32 %v540, %v562
    %566 = vrot.lane.b32.xlu0 %v560, 32
    %v567 = vpop.permute.xlu0 %566
    %570 = vrot.lane.b32.xlu0 %v564, 32
    %v571 = vpop.permute.xlu0 %570
    %v573 = vsel %vm51, %v567, %v571
    %vm574 = vcmask 523270
    %575 = vst.msk [vmem:[#allocation2] sm:$0xc0] %vm574, %v573
    %v576 = vld [vmem:[%s0 + $0x10] sm:$0x3]
    %v577 = vld [vmem:[%s0 + $0x18] sm:$0x3]
    %v578 = vrot.slane %v560, 6
    %579 = vrot.lane.b32.xlu0 %v578, 32
    %v580 = vpop.permute.xlu0 %579
    %v581 = vsel %vm51, %v580, 0
    %583 = vmatprep.subr.mxu0 0.0
    %584 = vmatpush1.msra.mxu0 0.0
    %585 = vmatprep.subr.mxu0 0.0
    %586 = vmatpush1.msra.mxu0 0.0
    %587 = vmatprep.subr.mxu0 0.0
    %588 = vmatpush1.msra.mxu0 0.0
    %589 = vmatprep.subr.mxu0 0.0
    %590 = vmatpush1.msra.mxu0 0.0
    %591 = vmatprep.subr.mxu0 0.0
    %592 = vmatpush1.msra.mxu0 0.0
    %593 = vmatprep.subr.mxu0 0.0
    %594 = vmatpush1.msra.mxu0 0.0
    %595 = vmatprep.subr.mxu0 0.0
    %596 = vmatpush1.msra.mxu0 0.0
    %597 = vmatprep.subr.mxu0 0.0
    %598 = vmatpush1.msra.mxu0 0.0
    %599 = vmatprep.subr.mxu0 0.0
    %600 = vmatpush1.msra.mxu0 0.0
    %601 = vmatprep.subr.mxu0 0.0
    %602 = vmatpush1.msra.mxu0 0.0
    %603 = vmatprep.subr.mxu0 0.0
    %604 = vmatpush1.msra.mxu0 0.0
    %605 = vmatprep.subr.mxu0 0.0
    %606 = vmatpush1.msra.mxu0 0.0
    %607 = vmatprep.subr.mxu0 %v46
    %608 = vmatpush1.msra.mxu0 %v45
    %609 = vmatprep.subr.mxu0 %v44
    %610 = vmatpush1.msra.mxu0 %v43
    %611 = vmatprep.subr.mxu0 %v42
    %612 = vmatpush1.msra.mxu0 %v41
    %613 = vmatprep.subr.mxu0 %v40
    %614 = vmatpush1.msra.mxu0 %v39
    %615 = vmatprep.subr.mxu0 0.0
    %616 = vmatpush2.msra.mxu0 0.0
    %617 = vmatprep.subr.mxu0 0.0
    %618 = vmatpush2.msra.mxu0 0.0
    %619 = vmatprep.subr.mxu0 0.0
    %620 = vmatpush2.msra.mxu0 0.0
    %621 = vmatprep.subr.mxu0 0.0
    %622 = vmatpush2.msra.mxu0 0.0
    %623 = vmatprep.subr.mxu0 0.0
    %624 = vmatpush2.msra.mxu0 0.0
    %625 = vmatprep.subr.mxu0 0.0
    %626 = vmatpush2.msra.mxu0 0.0
    %627 = vmatprep.subr.mxu0 0.0
    %628 = vmatpush2.msra.mxu0 0.0
    %629 = vmatprep.subr.mxu0 0.0
    %630 = vmatpush2.msra.mxu0 0.0
    %631 = vmatprep.subr.mxu0 0.0
    %632 = vmatpush2.msra.mxu0 0.0
    %633 = vmatprep.subr.mxu0 0.0
    %634 = vmatpush2.msra.mxu0 0.0
    %635 = vmatprep.subr.mxu0 0.0
    %636 = vmatpush2.msra.mxu0 0.0
    %637 = vmatprep.subr.mxu0 0.0
    %638 = vmatpush2.msra.mxu0 0.0
    %639 = vmatprep.subr.mxu0 0.0
    %640 = vmatpush2.msra.mxu0 0.0
    %641 = vmatprep.subr.mxu0 0.0
    %642 = vmatpush2.msra.mxu0 0.0
    %643 = vmatprep.subr.mxu0 0.0
    %644 = vmatpush2.msra.mxu0 0.0
    %645 = vmatprep.subr.mxu0 0.0
    %646 = vmatpush2.msra.mxu0 0.0
    %647 = vmatprep.mubr.f32.mxu0 0.0
    %648 = vmatmul.mubr.f32.gmra.mxu0 %v581
    %v649 = vpop.f32.mrf.mxu0
    %v650 = vadd.f32 0.0, %v649
    %v651 = vpop.f32.mrf.mxu0
    %v652 = vadd.f32 0.0, %v651
    %653 = vdwg.mxu0
    %v654 = vadd.f32 %v576, %v650
    %v655 = vadd.f32 %v577, %v652
    %v656 = vxor.u32 %v654, 2147483648
    %v657 = vmul.f32 %v656, 1.442695
    %v658 = vpow.pop %v657
    %v659 = vadd.f32 %v658, 1.0
    %v660 = vrcp.pop %v659
    %v661 = vmul.f32 1.0, %v660
    %v662 = vtanh.pop %v654
    %v663 = vxor.u32 %v655, 2147483648
    %v664 = vmul.f32 %v663, 1.442695
    %v665 = vpow.pop %v664
    %v666 = vadd.f32 %v665, 1.0
    %v667 = vrcp.pop %v666
    %v668 = vmul.f32 1.0, %v667
    %v670 = vrot.slane %v554, 6
    %v672 = vmul.f32 %v661, %v670
    %674 = vrot.lane.b32.xlu0 %v662, 64
    %v675 = vpop.permute.xlu0 %674
    %v677 = vmul.f32 %v661, %v675
    %679 = vrot.lane.b32.xlu0 %v677, 32
    %v680 = vpop.permute.xlu0 %679
    %v682 = vadd.f32 %v672, %v680
    %v683 = vtanh.pop %v682
    %685 = vrot.lane.b32.xlu0 %v683, 64
    %v686 = vpop.permute.xlu0 %685
    %v688 = vmul.f32 %v661, %v686
    %689 = vrot.lane.b32.xlu0 %v683, 96
    %v690 = vpop.permute.xlu0 %689
    %v692 = vmul.f32 %v668, %v690
    %694 = vrot.lane.b32.xlu0 %v688, 32
    %v695 = vpop.permute.xlu0 %694
    %698 = vrot.lane.b32.xlu0 %v692, 32
    %v699 = vpop.permute.xlu0 %698
    %v701 = vsel %vm51, %v695, %v699
    %702 = vst.msk [vmem:[#allocation2 + $0x8] sm:$0x3] %vm175, %v701
    %v703 = vld [vmem:[%s0 + $0x10] sm:$0xc]
    %v704 = vld [vmem:[%s0 + $0x18] sm:$0xc]
    %v705 = vsel %vm51, %v695, 0
    %707 = vmatprep.subr.mxu0 0.0
    %708 = vmatpush1.msra.mxu0 0.0
    %709 = vmatprep.subr.mxu0 0.0
    %710 = vmatpush1.msra.mxu0 0.0
    %711 = vmatprep.subr.mxu0 0.0
    %712 = vmatpush1.msra.mxu0 0.0
    %713 = vmatprep.subr.mxu0 0.0
    %714 = vmatpush1.msra.mxu0 0.0
    %715 = vmatprep.subr.mxu0 0.0
    %716 = vmatpush1.msra.mxu0 0.0
    %717 = vmatprep.subr.mxu0 0.0
    %718 = vmatpush1.msra.mxu0 0.0
    %719 = vmatprep.subr.mxu0 0.0
    %720 = vmatpush1.msra.mxu0 0.0
    %721 = vmatprep.subr.mxu0 0.0
    %722 = vmatpush1.msra.mxu0 0.0
    %723 = vmatprep.subr.mxu0 0.0
    %724 = vmatpush1.msra.mxu0 0.0
    %725 = vmatprep.subr.mxu0 0.0
    %726 = vmatpush1.msra.mxu0 0.0
    %727 = vmatprep.subr.mxu0 0.0
    %728 = vmatpush1.msra.mxu0 0.0
    %729 = vmatprep.subr.mxu0 0.0
    %730 = vmatpush1.msra.mxu0 0.0
    %731 = vmatprep.subr.mxu0 %v46
    %732 = vmatpush1.msra.mxu0 %v45
    %733 = vmatprep.subr.mxu0 %v44
    %734 = vmatpush1.msra.mxu0 %v43
    %735 = vmatprep.subr.mxu0 %v42
    %736 = vmatpush1.msra.mxu0 %v41
    %737 = vmatprep.subr.mxu0 %v40
    %738 = vmatpush1.msra.mxu0 %v39
    %739 = vmatprep.subr.mxu0 0.0
    %740 = vmatpush2.msra.mxu0 0.0
    %741 = vmatprep.subr.mxu0 0.0
    %742 = vmatpush2.msra.mxu0 0.0
    %743 = vmatprep.subr.mxu0 0.0
    %744 = vmatpush2.msra.mxu0 0.0
    %745 = vmatprep.subr.mxu0 0.0
    %746 = vmatpush2.msra.mxu0 0.0
    %747 = vmatprep.subr.mxu0 0.0
    %748 = vmatpush2.msra.mxu0 0.0
    %749 = vmatprep.subr.mxu0 0.0
    %750 = vmatpush2.msra.mxu0 0.0
    %751 = vmatprep.subr.mxu0 0.0
    %752 = vmatpush2.msra.mxu0 0.0
    %753 = vmatprep.subr.mxu0 0.0
    %754 = vmatpush2.msra.mxu0 0.0
    %755 = vmatprep.subr.mxu0 0.0
    %756 = vmatpush2.msra.mxu0 0.0
    %757 = vmatprep.subr.mxu0 0.0
    %758 = vmatpush2.msra.mxu0 0.0
    %759 = vmatprep.subr.mxu0 0.0
    %760 = vmatpush2.msra.mxu0 0.0
    %761 = vmatprep.subr.mxu0 0.0
    %762 = vmatpush2.msra.mxu0 0.0
    %763 = vmatprep.subr.mxu0 0.0
    %764 = vmatpush2.msra.mxu0 0.0
    %765 = vmatprep.subr.mxu0 0.0
    %766 = vmatpush2.msra.mxu0 0.0
    %767 = vmatprep.subr.mxu0 0.0
    %768 = vmatpush2.msra.mxu0 0.0
    %769 = vmatprep.subr.mxu0 0.0
    %770 = vmatpush2.msra.mxu0 0.0
    %771 = vmatprep.mubr.f32.mxu0 0.0
    %772 = vmatmul.mubr.f32.gmra.mxu0 %v705
    %v773 = vpop.f32.mrf.mxu0
    %v774 = vadd.f32 0.0, %v773
    %v775 = vpop.f32.mrf.mxu0
    %v776 = vadd.f32 0.0, %v775
    %777 = vdwg.mxu0
    %v780 = vrot.slane %v774, 6
    %v781 = vrot.slane %v776, 6
    %v784 = vadd.f32 %v703, %v780
    %v785 = vadd.f32 %v704, %v781
    %v786 = vxor.u32 %v784, 2147483648
    %v787 = vmul.f32 %v786, 1.442695
    %v788 = vpow.pop %v787
    %v789 = vadd.f32 %v788, 1.0
    %v790 = vrcp.pop %v789
    %v791 = vmul.f32 1.0, %v790
    %v792 = vtanh.pop %v784
    %v793 = vxor.u32 %v785, 2147483648
    %v794 = vmul.f32 %v793, 1.442695
    %v795 = vpow.pop %v794
    %v796 = vadd.f32 %v795, 1.0
    %v797 = vrcp.pop %v796
    %v798 = vmul.f32 1.0, %v797
    %v800 = vrot.slane %v682, 6
    %v802 = vmul.f32 %v791, %v800
    %804 = vrot.lane.b32.xlu0 %v792, 64
    %v805 = vpop.permute.xlu0 %804
    %v807 = vmul.f32 %v791, %v805
    %809 = vrot.lane.b32.xlu0 %v807, 32
    %v810 = vpop.permute.xlu0 %809
    %v812 = vadd.f32 %v802, %v810
    %v813 = vtanh.pop %v812
    %815 = vrot.lane.b32.xlu0 %v813, 64
    %v816 = vpop.permute.xlu0 %815
    %v818 = vmul.f32 %v791, %v816
    %819 = vrot.lane.b32.xlu0 %v813, 96
    %v820 = vpop.permute.xlu0 %819
    %v822 = vmul.f32 %v798, %v820
    %824 = vrot.lane.b32.xlu0 %v818, 32
    %v825 = vpop.permute.xlu0 %824
    %828 = vrot.lane.b32.xlu0 %v822, 32
    %v829 = vpop.permute.xlu0 %828
    %v831 = vsel %vm51, %v825, %v829
    %832 = vst.msk [vmem:[#allocation2 + $0x8] sm:$0xc] %vm306, %v831
    %v833 = vld [vmem:[%s0 + $0x10] sm:$0x30]
    %v834 = vld [vmem:[%s0 + $0x18] sm:$0x30]
    %v835 = vrot.slane %v818, 2
    %836 = vrot.lane.b32.xlu0 %v835, 32
    %v837 = vpop.permute.xlu0 %836
    %v838 = vsel %vm51, %v837, 0
    %840 = vmatprep.subr.mxu0 0.0
    %841 = vmatpush1.msra.mxu0 0.0
    %842 = vmatprep.subr.mxu0 0.0
    %843 = vmatpush1.msra.mxu0 0.0
    %844 = vmatprep.subr.mxu0 0.0
    %845 = vmatpush1.msra.mxu0 0.0
    %846 = vmatprep.subr.mxu0 0.0
    %847 = vmatpush1.msra.mxu0 0.0
    %848 = vmatprep.subr.mxu0 0.0
    %849 = vmatpush1.msra.mxu0 0.0
    %850 = vmatprep.subr.mxu0 0.0
    %851 = vmatpush1.msra.mxu0 0.0
    %852 = vmatprep.subr.mxu0 0.0
    %853 = vmatpush1.msra.mxu0 0.0
    %854 = vmatprep.subr.mxu0 0.0
    %855 = vmatpush1.msra.mxu0 0.0
    %856 = vmatprep.subr.mxu0 0.0
    %857 = vmatpush1.msra.mxu0 0.0
    %858 = vmatprep.subr.mxu0 0.0
    %859 = vmatpush1.msra.mxu0 0.0
    %860 = vmatprep.subr.mxu0 0.0
    %861 = vmatpush1.msra.mxu0 0.0
    %862 = vmatprep.subr.mxu0 0.0
    %863 = vmatpush1.msra.mxu0 0.0
    %864 = vmatprep.subr.mxu0 %v46
    %865 = vmatpush1.msra.mxu0 %v45
    %866 = vmatprep.subr.mxu0 %v44
    %867 = vmatpush1.msra.mxu0 %v43
    %868 = vmatprep.subr.mxu0 %v42
    %869 = vmatpush1.msra.mxu0 %v41
    %870 = vmatprep.subr.mxu0 %v40
    %871 = vmatpush1.msra.mxu0 %v39
    %872 = vmatprep.subr.mxu0 0.0
    %873 = vmatpush2.msra.mxu0 0.0
    %874 = vmatprep.subr.mxu0 0.0
    %875 = vmatpush2.msra.mxu0 0.0
    %876 = vmatprep.subr.mxu0 0.0
    %877 = vmatpush2.msra.mxu0 0.0
    %878 = vmatprep.subr.mxu0 0.0
    %879 = vmatpush2.msra.mxu0 0.0
    %880 = vmatprep.subr.mxu0 0.0
    %881 = vmatpush2.msra.mxu0 0.0
    %882 = vmatprep.subr.mxu0 0.0
    %883 = vmatpush2.msra.mxu0 0.0
    %884 = vmatprep.subr.mxu0 0.0
    %885 = vmatpush2.msra.mxu0 0.0
    %886 = vmatprep.subr.mxu0 0.0
    %887 = vmatpush2.msra.mxu0 0.0
    %888 = vmatprep.subr.mxu0 0.0
    %889 = vmatpush2.msra.mxu0 0.0
    %890 = vmatprep.subr.mxu0 0.0
    %891 = vmatpush2.msra.mxu0 0.0
    %892 = vmatprep.subr.mxu0 0.0
    %893 = vmatpush2.msra.mxu0 0.0
    %894 = vmatprep.subr.mxu0 0.0
    %895 = vmatpush2.msra.mxu0 0.0
    %896 = vmatprep.subr.mxu0 0.0
    %897 = vmatpush2.msra.mxu0 0.0
    %898 = vmatprep.subr.mxu0 0.0
    %899 = vmatpush2.msra.mxu0 0.0
    %900 = vmatprep.subr.mxu0 0.0
    %901 = vmatpush2.msra.mxu0 0.0
    %902 = vmatprep.subr.mxu0 0.0
    %903 = vmatpush2.msra.mxu0 0.0
    %904 = vmatprep.mubr.f32.mxu0 0.0
    %905 = vmatmul.mubr.f32.gmra.mxu0 %v838
    %v906 = vpop.f32.mrf.mxu0
    %v907 = vadd.f32 0.0, %v906
    %v908 = vpop.f32.mrf.mxu0
    %v909 = vadd.f32 0.0, %v908
    %910 = vdwg.mxu0
    %v913 = vrot.slane %v907, 4
    %v914 = vrot.slane %v909, 4
    %v917 = vadd.f32 %v833, %v913
    %v918 = vadd.f32 %v834, %v914
    %v919 = vxor.u32 %v917, 2147483648
    %v920 = vmul.f32 %v919, 1.442695
    %v921 = vpow.pop %v920
    %v922 = vadd.f32 %v921, 1.0
    %v923 = vrcp.pop %v922
    %v924 = vmul.f32 1.0, %v923
    %v925 = vtanh.pop %v917
    %v926 = vxor.u32 %v918, 2147483648
    %v927 = vmul.f32 %v926, 1.442695
    %v928 = vpow.pop %v927
    %v929 = vadd.f32 %v928, 1.0
    %v930 = vrcp.pop %v929
    %v931 = vmul.f32 1.0, %v930
    %v933 = vrot.slane %v812, 6
    %v935 = vmul.f32 %v924, %v933
    %937 = vrot.lane.b32.xlu0 %v925, 64
    %v938 = vpop.permute.xlu0 %937
    %v940 = vmul.f32 %v924, %v938
    %942 = vrot.lane.b32.xlu0 %v940, 32
    %v943 = vpop.permute.xlu0 %942
    %v945 = vadd.f32 %v935, %v943
    %v946 = vtanh.pop %v945
    %948 = vrot.lane.b32.xlu0 %v946, 64
    %v949 = vpop.permute.xlu0 %948
    %v951 = vmul.f32 %v924, %v949
    %952 = vrot.lane.b32.xlu0 %v946, 96
    %v953 = vpop.permute.xlu0 %952
    %v955 = vmul.f32 %v931, %v953
    %957 = vrot.lane.b32.xlu0 %v951, 32
    %v958 = vpop.permute.xlu0 %957
    %961 = vrot.lane.b32.xlu0 %v955, 32
    %v962 = vpop.permute.xlu0 %961
    %v964 = vsel %vm51, %v958, %v962
    %965 = vst.msk [vmem:[#allocation2 + $0x8] sm:$0x30] %vm440, %v964
    %v966 = vld [vmem:[%s0 + $0x10] sm:$0xc0]
    %v967 = vld [vmem:[%s0 + $0x18] sm:$0xc0]
    %v968 = vrot.slane %v951, 4
    %969 = vrot.lane.b32.xlu0 %v968, 32
    %v970 = vpop.permute.xlu0 %969
    %v971 = vsel %vm51, %v970, 0
    %973 = vmatprep.subr.mxu0 0.0
    %974 = vmatpush1.msra.mxu0 0.0
    %975 = vmatprep.subr.mxu0 0.0
    %976 = vmatpush1.msra.mxu0 0.0
    %977 = vmatprep.subr.mxu0 0.0
    %978 = vmatpush1.msra.mxu0 0.0
    %979 = vmatprep.subr.mxu0 0.0
    %980 = vmatpush1.msra.mxu0 0.0
    %981 = vmatprep.subr.mxu0 0.0
    %982 = vmatpush1.msra.mxu0 0.0
    %983 = vmatprep.subr.mxu0 0.0
    %984 = vmatpush1.msra.mxu0 0.0
    %985 = vmatprep.subr.mxu0 0.0
    %986 = vmatpush1.msra.mxu0 0.0
    %987 = vmatprep.subr.mxu0 0.0
    %988 = vmatpush1.msra.mxu0 0.0
    %989 = vmatprep.subr.mxu0 0.0
    %990 = vmatpush1.msra.mxu0 0.0
    %991 = vmatprep.subr.mxu0 0.0
    %992 = vmatpush1.msra.mxu0 0.0
    %993 = vmatprep.subr.mxu0 0.0
    %994 = vmatpush1.msra.mxu0 0.0
    %995 = vmatprep.subr.mxu0 0.0
    %996 = vmatpush1.msra.mxu0 0.0
    %997 = vmatprep.subr.mxu0 %v46
    %998 = vmatpush1.msra.mxu0 %v45
    %999 = vmatprep.subr.mxu0 %v44
    %1000 = vmatpush1.msra.mxu0 %v43
    %1001 = vmatprep.subr.mxu0 %v42
    %1002 = vmatpush1.msra.mxu0 %v41
    %1003 = vmatprep.subr.mxu0 %v40
    %1004 = vmatpush1.msra.mxu0 %v39
    %1005 = vmatprep.subr.mxu0 0.0
    %1006 = vmatpush2.msra.mxu0 0.0
    %1007 = vmatprep.subr.mxu0 0.0
    %1008 = vmatpush2.msra.mxu0 0.0
    %1009 = vmatprep.subr.mxu0 0.0
    %1010 = vmatpush2.msra.mxu0 0.0
    %1011 = vmatprep.subr.mxu0 0.0
    %1012 = vmatpush2.msra.mxu0 0.0
    %1013 = vmatprep.subr.mxu0 0.0
    %1014 = vmatpush2.msra.mxu0 0.0
    %1015 = vmatprep.subr.mxu0 0.0
    %1016 = vmatpush2.msra.mxu0 0.0
    %1017 = vmatprep.subr.mxu0 0.0
    %1018 = vmatpush2.msra.mxu0 0.0
    %1019 = vmatprep.subr.mxu0 0.0
    %1020 = vmatpush2.msra.mxu0 0.0
    %1021 = vmatprep.subr.mxu0 0.0
    %1022 = vmatpush2.msra.mxu0 0.0
    %1023 = vmatprep.subr.mxu0 0.0
    %1024 = vmatpush2.msra.mxu0 0.0
    %1025 = vmatprep.subr.mxu0 0.0
    %1026 = vmatpush2.msra.mxu0 0.0
    %1027 = vmatprep.subr.mxu0 0.0
    %1028 = vmatpush2.msra.mxu0 0.0
    %1029 = vmatprep.subr.mxu0 0.0
    %1030 = vmatpush2.msra.mxu0 0.0
    %1031 = vmatprep.subr.mxu0 0.0
    %1032 = vmatpush2.msra.mxu0 0.0
    %1033 = vmatprep.subr.mxu0 0.0
    %1034 = vmatpush2.msra.mxu0 0.0
    %1035 = vmatprep.subr.mxu0 0.0
    %1036 = vmatpush2.msra.mxu0 0.0
    %1037 = vmatprep.mubr.f32.mxu0 0.0
    %1038 = vmatmul.mubr.f32.gmra.mxu0 %v971
    %v1039 = vpop.f32.mrf.mxu0
    %v1040 = vadd.f32 0.0, %v1039
    %v1041 = vpop.f32.mrf.mxu0
    %v1042 = vadd.f32 0.0, %v1041
    %1043 = vdwg.mxu0
    %v1046 = vrot.slane %v1040, 2
    %v1047 = vrot.slane %v1042, 2
    %v1050 = vadd.f32 %v966, %v1046
    %v1051 = vadd.f32 %v967, %v1047
    %v1052 = vxor.u32 %v1050, 2147483648
    %v1053 = vmul.f32 %v1052, 1.442695
    %v1054 = vpow.pop %v1053
    %v1055 = vadd.f32 %v1054, 1.0
    %v1056 = vrcp.pop %v1055
    %v1057 = vmul.f32 1.0, %v1056
    %v1058 = vtanh.pop %v1050
    %v1059 = vxor.u32 %v1051, 2147483648
    %v1060 = vmul.f32 %v1059, 1.442695
    %v1061 = vpow.pop %v1060
    %v1062 = vadd.f32 %v1061, 1.0
    %v1063 = vrcp.pop %v1062
    %v1064 = vmul.f32 1.0, %v1063
    %v1066 = vrot.slane %v945, 6
    %v1068 = vmul.f32 %v1057, %v1066
    %1070 = vrot.lane.b32.xlu0 %v1058, 64
    %v1071 = vpop.permute.xlu0 %1070
    %v1073 = vmul.f32 %v1057, %v1071
    %1075 = vrot.lane.b32.xlu0 %v1073, 32
    %v1076 = vpop.permute.xlu0 %1075
    %v1078 = vadd.f32 %v1068, %v1076
    %v1079 = vtanh.pop %v1078
    %1081 = vrot.lane.b32.xlu0 %v1079, 64
    %v1082 = vpop.permute.xlu0 %1081
    %v1084 = vmul.f32 %v1057, %v1082
    %1085 = vrot.lane.b32.xlu0 %v1079, 96
    %v1086 = vpop.permute.xlu0 %1085
    %v1088 = vmul.f32 %v1064, %v1086
    %1090 = vrot.lane.b32.xlu0 %v1084, 32
    %v1091 = vpop.permute.xlu0 %1090
    %1094 = vrot.lane.b32.xlu0 %v1088, 32
    %v1095 = vpop.permute.xlu0 %1094
    %v1097 = vsel %vm51, %v1091, %v1095
    %1098 = vst.msk [vmem:[#allocation2 + $0x8] sm:$0xc0] %vm574, %v1097
    %v1099 = vld [vmem:[#allocation2] sm:$0xff]
    %v1100 = vld [vmem:[#allocation2 + $0x8] sm:$0xff]
    %v1101 = vld [vmem:[%s4] sm:$0xff]
    %v1102 = vld [vmem:[%s4 + $0x8] sm:$0xff]
    %v1103 = vld [vmem:[%s4 + $0x10] sm:$0xff]
    %v1104 = vld [vmem:[%s4 + $0x18] sm:$0xff]
    %v1105 = vld [vmem:[%s4 + $0x20] sm:$0xff]
    %v1106 = vld [vmem:[%s4 + $0x28] sm:$0xff]
    %v1107 = vld [vmem:[%s4 + $0x30] sm:$0xff]
    %v1108 = vld [vmem:[%s4 + $0x38] sm:$0xff]
    %v1109 = vld [vmem:[%s4 + $0x40] sm:$0xff]
    %v1110 = vld [vmem:[%s4 + $0x48] sm:$0xff]
    %v1111 = vld [vmem:[%s4 + $0x50] sm:$0xff]
    %v1112 = vld [vmem:[%s4 + $0x58] sm:$0xff]
    %v1113 = vld [vmem:[%s4 + $0x60] sm:$0xff]
    %v1114 = vld [vmem:[%s4 + $0x68] sm:$0xff]
    %v1115 = vld [vmem:[%s4 + $0x70] sm:$0xff]
    %v1116 = vld [vmem:[%s4 + $0x78] sm:$0xff]
    %v1117 = vld [vmem:[%s4 + $0x80] sm:$0xff]
    %v1118 = vld [vmem:[%s4 + $0x88] sm:$0xff]
    %v1119 = vld [vmem:[%s4 + $0x90] sm:$0xff]
    %v1120 = vld [vmem:[%s4 + $0x98] sm:$0xff]
    %v1121 = vld [vmem:[%s4 + $0xa0] sm:$0xff]
    %v1122 = vld [vmem:[%s4 + $0xa8] sm:$0xff]
    %v1123 = vld [vmem:[%s4 + $0xb0] sm:$0xff]
    %v1124 = vld [vmem:[%s4 + $0xb8] sm:$0xff]
    %v1125 = vld [vmem:[%s4 + $0xc0] sm:$0xff]
    %v1126 = vld [vmem:[%s4 + $0xc8] sm:$0xff]
    %v1127 = vld [vmem:[%s4 + $0xd0] sm:$0xff]
    %v1128 = vld [vmem:[%s4 + $0xd8] sm:$0xff]
    %v1129 = vld [vmem:[%s4 + $0xe0] sm:$0xff]
    %v1130 = vld [vmem:[%s4 + $0xe8] sm:$0xff]
    %v1131 = vld [vmem:[%s4 + $0xf0] sm:$0xff]
    %v1132 = vld [vmem:[%s4 + $0xf8] sm:$0xff]
    %v1133 = vld [vmem:[%s4 + $0x100] sm:$0xff]
    %v1134 = vld [vmem:[%s4 + $0x108] sm:$0xff]
    %v1135 = vld [vmem:[%s4 + $0x110] sm:$0xff]
    %v1136 = vld [vmem:[%s4 + $0x118] sm:$0xff]
    %v1137 = vld [vmem:[%s4 + $0x120] sm:$0xff]
    %v1138 = vld [vmem:[%s4 + $0x128] sm:$0xff]
    %v1139 = vld [vmem:[%s4 + $0x130] sm:$0xff]
    %v1140 = vld [vmem:[%s4 + $0x138] sm:$0xff]
    %v1141 = vld [vmem:[%s5] sm:$0xff]
    %v1142 = vld [vmem:[%s5 + $0x8] sm:$0xff]
    %v1143 = vld [vmem:[%s5 + $0x10] sm:$0xff]
    %v1144 = vld [vmem:[%s5 + $0x18] sm:$0xff]
    %v1145 = vld [vmem:[%s5 + $0x20] sm:$0xff]
    %v1146 = vld [vmem:[%s5 + $0x28] sm:$0xff]
    %v1147 = vld [vmem:[%s5 + $0x30] sm:$0xff]
    %v1148 = vld [vmem:[%s5 + $0x38] sm:$0xff]
    %v1149 = vld [vmem:[%s5 + $0x40] sm:$0xff]
    %v1150 = vld [vmem:[%s5 + $0x48] sm:$0xff]
    %vm1151 = vcmask 523264
    %v1153 = vsel %vm1151, %v1099, 0
    %v1156 = vsel %vm1151, %v1100, 0
    %1158 = vmatprep.subr.mxu0 0.0
    %1159 = vmatpush1.msra.mxu0 0.0
    %1160 = vmatprep.subr.mxu0 0.0
    %1161 = vmatpush1.msra.mxu0 0.0
    %1162 = vmatprep.subr.mxu0 0.0
    %1163 = vmatpush1.msra.mxu0 0.0
    %1164 = vmatprep.subr.mxu0 0.0
    %1165 = vmatpush1.msra.mxu0 0.0
    %1166 = vmatprep.subr.mxu0 0.0
    %1167 = vmatpush1.msra.mxu0 0.0
    %1168 = vmatprep.subr.mxu0 0.0
    %1169 = vmatpush1.msra.mxu0 0.0
    %1170 = vmatprep.subr.mxu0 0.0
    %1171 = vmatpush1.msra.mxu0 0.0
    %1172 = vmatprep.subr.mxu0 0.0
    %1173 = vmatpush1.msra.mxu0 0.0
    %1174 = vmatprep.subr.mxu0 %v1137
    %1175 = vmatpush1.msra.mxu0 %v1136
    %1176 = vmatprep.subr.mxu0 %v1132
    %1177 = vmatpush1.msra.mxu0 %v1131
    %1178 = vmatprep.subr.mxu0 %v1127
    %1179 = vmatpush1.msra.mxu0 %v1126
    %1180 = vmatprep.subr.mxu0 %v1122
    %1181 = vmatpush1.msra.mxu0 %v1121
    %1182 = vmatprep.subr.mxu0 %v1117
    %1183 = vmatpush1.msra.mxu0 %v1116
    %1184 = vmatprep.subr.mxu0 %v1112
    %1185 = vmatpush1.msra.mxu0 %v1111
    %1186 = vmatprep.subr.mxu0 %v1107
    %1187 = vmatpush1.msra.mxu0 %v1106
    %1188 = vmatprep.subr.mxu0 %v1102
    %1189 = vmatpush1.msra.mxu0 %v1101
    %1190 = vmatprep.subr.mxu0 0.0
    %1191 = vmatpush2.msra.mxu0 0.0
    %1192 = vmatprep.subr.mxu0 0.0
    %1193 = vmatpush2.msra.mxu0 0.0
    %1194 = vmatprep.subr.mxu0 0.0
    %1195 = vmatpush2.msra.mxu0 0.0
    %1196 = vmatprep.subr.mxu0 0.0
    %1197 = vmatpush2.msra.mxu0 0.0
    %1198 = vmatprep.subr.mxu0 0.0
    %1199 = vmatpush2.msra.mxu0 0.0
    %1200 = vmatprep.subr.mxu0 0.0
    %1201 = vmatpush2.msra.mxu0 0.0
    %1202 = vmatprep.subr.mxu0 0.0
    %1203 = vmatpush2.msra.mxu0 0.0
    %1204 = vmatprep.subr.mxu0 0.0
    %1205 = vmatpush2.msra.mxu0 0.0
    %1206 = vmatprep.subr.mxu0 0.0
    %1207 = vmatpush2.msra.mxu0 0.0
    %1208 = vmatprep.subr.mxu0 0.0
    %1209 = vmatpush2.msra.mxu0 0.0
    %1210 = vmatprep.subr.mxu0 0.0
    %1211 = vmatpush2.msra.mxu0 0.0
    %1212 = vmatprep.subr.mxu0 0.0
    %1213 = vmatpush2.msra.mxu0 0.0
    %1214 = vmatprep.subr.mxu0 0.0
    %1215 = vmatpush2.msra.mxu0 0.0
    %1216 = vmatprep.subr.mxu0 0.0
    %1217 = vmatpush2.msra.mxu0 0.0
    %1218 = vmatprep.subr.mxu0 0.0
    %1219 = vmatpush2.msra.mxu0 0.0
    %1220 = vmatprep.subr.mxu0 0.0
    %1221 = vmatpush2.msra.mxu0 0.0
    %1222 = vmatprep.mubr.f32.mxu0 0.0
    %1223 = vmatmul.mubr.f32.gmra.mxu0 %v1153
    %v1224 = vpop.f32.mrf.mxu0
    %v1225 = vadd.f32 %v1141, %v1224
    %v1226 = vpop.f32.mrf.mxu0
    %v1227 = vadd.f32 %v1142, %v1226
    %1228 = vmatprep.mubr.f32.mxu0 0.0
    %1229 = vmatmul.mubr.f32.gmra.mxu0 %v1156
    %v1230 = vpop.f32.mrf.mxu0
    %v1231 = vadd.f32 %v1146, %v1230
    %v1232 = vpop.f32.mrf.mxu0
    %v1233 = vadd.f32 %v1147, %v1232
    %1234 = vdwg.mxu0
    %1235 = vmatprep.subr.mxu0 0.0
    %1236 = vmatpush1.msra.mxu0 0.0
    %1237 = vmatprep.subr.mxu0 0.0
    %1238 = vmatpush1.msra.mxu0 0.0
    %1239 = vmatprep.subr.mxu0 0.0
    %1240 = vmatpush1.msra.mxu0 0.0
    %1241 = vmatprep.subr.mxu0 0.0
    %1242 = vmatpush1.msra.mxu0 0.0
    %1243 = vmatprep.subr.mxu0 0.0
    %1244 = vmatpush1.msra.mxu0 0.0
    %1245 = vmatprep.subr.mxu0 0.0
    %1246 = vmatpush1.msra.mxu0 0.0
    %1247 = vmatprep.subr.mxu0 0.0
    %1248 = vmatpush1.msra.mxu0 0.0
    %1249 = vmatprep.subr.mxu0 0.0
    %1250 = vmatpush1.msra.mxu0 0.0
    %1251 = vmatprep.subr.mxu0 %v1139
    %1252 = vmatpush1.msra.mxu0 %v1138
    %1253 = vmatprep.subr.mxu0 %v1134
    %1254 = vmatpush1.msra.mxu0 %v1133
    %1255 = vmatprep.subr.mxu0 %v1129
    %1256 = vmatpush1.msra.mxu0 %v1128
    %1257 = vmatprep.subr.mxu0 %v1124
    %1258 = vmatpush1.msra.mxu0 %v1123
    %1259 = vmatprep.subr.mxu0 %v1119
    %1260 = vmatpush1.msra.mxu0 %v1118
    %1261 = vmatprep.subr.mxu0 %v1114
    %1262 = vmatpush1.msra.mxu0 %v1113
    %1263 = vmatprep.subr.mxu0 %v1109
    %1264 = vmatpush1.msra.mxu0 %v1108
    %1265 = vmatprep.subr.mxu0 %v1104
    %1266 = vmatpush1.msra.mxu0 %v1103
    %1267 = vmatprep.subr.mxu0 0.0
    %1268 = vmatpush2.msra.mxu0 0.0
    %1269 = vmatprep.subr.mxu0 0.0
    %1270 = vmatpush2.msra.mxu0 0.0
    %1271 = vmatprep.subr.mxu0 0.0
    %1272 = vmatpush2.msra.mxu0 0.0
    %1273 = vmatprep.subr.mxu0 0.0
    %1274 = vmatpush2.msra.mxu0 0.0
    %1275 = vmatprep.subr.mxu0 0.0
    %1276 = vmatpush2.msra.mxu0 0.0
    %1277 = vmatprep.subr.mxu0 0.0
    %1278 = vmatpush2.msra.mxu0 0.0
    %1279 = vmatprep.subr.mxu0 0.0
    %1280 = vmatpush2.msra.mxu0 0.0
    %1281 = vmatprep.subr.mxu0 0.0
    %1282 = vmatpush2.msra.mxu0 0.0
    %1283 = vmatprep.subr.mxu0 0.0
    %1284 = vmatpush2.msra.mxu0 0.0
    %1285 = vmatprep.subr.mxu0 0.0
    %1286 = vmatpush2.msra.mxu0 0.0
    %1287 = vmatprep.subr.mxu0 0.0
    %1288 = vmatpush2.msra.mxu0 0.0
    %1289 = vmatprep.subr.mxu0 0.0
    %1290 = vmatpush2.msra.mxu0 0.0
    %1291 = vmatprep.subr.mxu0 0.0
    %1292 = vmatpush2.msra.mxu0 0.0
    %1293 = vmatprep.subr.mxu0 0.0
    %1294 = vmatpush2.msra.mxu0 0.0
    %1295 = vmatprep.subr.mxu0 0.0
    %1296 = vmatpush2.msra.mxu0 0.0
    %1297 = vmatprep.subr.mxu0 0.0
    %1298 = vmatpush2.msra.mxu0 0.0
    %1299 = vmatprep.mubr.f32.mxu0 0.0
    %1300 = vmatmul.mubr.f32.gmra.mxu0 %v1153
    %v1301 = vpop.f32.mrf.mxu0
    %v1302 = vadd.f32 %v1143, %v1301
    %v1303 = vpop.f32.mrf.mxu0
    %v1304 = vadd.f32 %v1144, %v1303
    %1305 = vmatprep.mubr.f32.mxu0 0.0
    %1306 = vmatmul.mubr.f32.gmra.mxu0 %v1156
    %v1307 = vpop.f32.mrf.mxu0
    %v1308 = vadd.f32 %v1148, %v1307
    %v1309 = vpop.f32.mrf.mxu0
    %v1310 = vadd.f32 %v1149, %v1309
    %1311 = vdwg.mxu0
    %1312 = vmatprep.subr.mxu0 0.0
    %1313 = vmatpush1.msra.mxu0 0.0
    %1314 = vmatprep.subr.mxu0 0.0
    %1315 = vmatpush1.msra.mxu0 0.0
    %1316 = vmatprep.subr.mxu0 0.0
    %1317 = vmatpush1.msra.mxu0 0.0
    %1318 = vmatprep.subr.mxu0 0.0
    %1319 = vmatpush1.msra.mxu0 0.0
    %1320 = vmatprep.subr.mxu0 0.0
    %1321 = vmatpush1.msra.mxu0 0.0
    %1322 = vmatprep.subr.mxu0 0.0
    %1323 = vmatpush1.msra.mxu0 0.0
    %1324 = vmatprep.subr.mxu0 0.0
    %1325 = vmatpush1.msra.mxu0 0.0
    %1326 = vmatprep.subr.mxu0 0.0
    %1327 = vmatpush1.msra.mxu0 0.0
    %1328 = vmatprep.subr.mxu0 0.0
    %1329 = vmatpush1.msra.mxu0 %v1140
    %1330 = vmatprep.subr.mxu0 0.0
    %1331 = vmatpush1.msra.mxu0 %v1135
    %1332 = vmatprep.subr.mxu0 0.0
    %1333 = vmatpush1.msra.mxu0 %v1130
    %1334 = vmatprep.subr.mxu0 0.0
    %1335 = vmatpush1.msra.mxu0 %v1125
    %1336 = vmatprep.subr.mxu0 0.0
    %1337 = vmatpush1.msra.mxu0 %v1120
    %1338 = vmatprep.subr.mxu0 0.0
    %1339 = vmatpush1.msra.mxu0 %v1115
    %1340 = vmatprep.subr.mxu0 0.0
    %1341 = vmatpush1.msra.mxu0 %v1110
    %1342 = vmatprep.subr.mxu0 0.0
    %1343 = vmatpush1.msra.mxu0 %v1105
    %1344 = vmatprep.subr.mxu0 0.0
    %1345 = vmatpush2.msra.mxu0 0.0
    %1346 = vmatprep.subr.mxu0 0.0
    %1347 = vmatpush2.msra.mxu0 0.0
    %1348 = vmatprep.subr.mxu0 0.0
    %1349 = vmatpush2.msra.mxu0 0.0
    %1350 = vmatprep.subr.mxu0 0.0
    %1351 = vmatpush2.msra.mxu0 0.0
    %1352 = vmatprep.subr.mxu0 0.0
    %1353 = vmatpush2.msra.mxu0 0.0
    %1354 = vmatprep.subr.mxu0 0.0
    %1355 = vmatpush2.msra.mxu0 0.0
    %1356 = vmatprep.subr.mxu0 0.0
    %1357 = vmatpush2.msra.mxu0 0.0
    %1358 = vmatprep.subr.mxu0 0.0
    %1359 = vmatpush2.msra.mxu0 0.0
    %1360 = vmatprep.subr.mxu0 0.0
    %1361 = vmatpush2.msra.mxu0 0.0
    %1362 = vmatprep.subr.mxu0 0.0
    %1363 = vmatpush2.msra.mxu0 0.0
    %1364 = vmatprep.subr.mxu0 0.0
    %1365 = vmatpush2.msra.mxu0 0.0
    %1366 = vmatprep.subr.mxu0 0.0
    %1367 = vmatpush2.msra.mxu0 0.0
    %1368 = vmatprep.subr.mxu0 0.0
    %1369 = vmatpush2.msra.mxu0 0.0
    %1370 = vmatprep.subr.mxu0 0.0
    %1371 = vmatpush2.msra.mxu0 0.0
    %1372 = vmatprep.subr.mxu0 0.0
    %1373 = vmatpush2.msra.mxu0 0.0
    %1374 = vmatprep.subr.mxu0 0.0
    %1375 = vmatpush2.msra.mxu0 0.0
    %1376 = vmatprep.mubr.f32.mxu0 0.0
    %1377 = vmatmul.mubr.f32.gmra.mxu0 %v1153
    %v1378 = vpop.f32.mrf.mxu0
    %v1379 = vadd.f32 %v1145, %v1378
    %v1380 = vpop.f32.mrf.mxu0
    %1381 = vmatprep.mubr.f32.mxu0 0.0
    %1382 = vmatmul.mubr.f32.gmra.mxu0 %v1156
    %v1383 = vpop.f32.mrf.mxu0
    %v1384 = vadd.f32 %v1150, %v1383
    %v1385 = vpop.f32.mrf.mxu0
    %1386 = vdwg.mxu0
    %v1387 = vtanh.pop %v1225
    %v1388 = vtanh.pop %v1227
    %v1389 = vtanh.pop %v1302
    %v1390 = vtanh.pop %v1304
    %v1391 = vtanh.pop %v1379
    %v1392 = vtanh.pop %v1231
    %v1393 = vtanh.pop %v1233
    %v1394 = vtanh.pop %v1308
    %v1395 = vtanh.pop %v1310
    %v1396 = vtanh.pop %v1384
    %v1397 = vld [vmem:[%s6] sm:$0xff]
    %v1398 = vld [vmem:[%s6 + $0x8] sm:$0xff]
    %v1399 = vld [vmem:[%s6 + $0x10] sm:$0xff]
    %v1400 = vld [vmem:[%s6 + $0x18] sm:$0xff]
    %v1401 = vld [vmem:[%s6 + $0x20] sm:$0xff]
    %v1402 = vld [vmem:[%s6 + $0x28] sm:$0xff]
    %v1403 = vld [vmem:[%s6 + $0x30] sm:$0xff]
    %v1404 = vld [vmem:[%s6 + $0x38] sm:$0xff]
    %v1405 = vld [vmem:[%s6 + $0x40] sm:$0xff]
    %v1406 = vld [vmem:[%s6 + $0x48] sm:$0xff]
    %v1407 = vld [vmem:[%s6 + $0x50] sm:$0xff]
    %v1408 = vld [vmem:[%s6 + $0x58] sm:$0xff]
    %v1409 = vld [vmem:[%s6 + $0x60] sm:$0xff]
    %v1410 = vld [vmem:[%s6 + $0x68] sm:$0xff]
    %v1411 = vld [vmem:[%s6 + $0x70] sm:$0xff]
    %v1412 = vld [vmem:[%s6 + $0x78] sm:$0xff]
    %v1413 = vld [vmem:[%s6 + $0x80] sm:$0xff]
    %v1414 = vld [vmem:[%s6 + $0x88] sm:$0xff]
    %v1415 = vld [vmem:[%s6 + $0x90] sm:$0xff]
    %v1416 = vld [vmem:[%s6 + $0x98] sm:$0xff]
    %v1417 = vld [vmem:[%s6 + $0xa0] sm:$0xff]
    %v1418 = vld [vmem:[%s6 + $0xa8] sm:$0xff]
    %v1419 = vld [vmem:[%s6 + $0xb0] sm:$0xff]
    %v1420 = vld [vmem:[%s6 + $0xb8] sm:$0xff]
    %v1421 = vld [vmem:[%s6 + $0xc0] sm:$0xff]
    %v1422 = vld [vmem:[%s6 + $0xc8] sm:$0xff]
    %v1423 = vld [vmem:[%s6 + $0xd0] sm:$0xff]
    %v1424 = vld [vmem:[%s6 + $0xd8] sm:$0xff]
    %v1425 = vld [vmem:[%s6 + $0xe0] sm:$0xff]
    %v1426 = vld [vmem:[%s6 + $0xe8] sm:$0xff]
    %v1427 = vld [vmem:[%s6 + $0xf0] sm:$0xff]
    %v1428 = vld [vmem:[%s6 + $0xf8] sm:$0xff]
    %v1429 = vld [vmem:[%s6 + $0x100] sm:$0xff]
    %v1430 = vld [vmem:[%s6 + $0x108] sm:$0xff]
    %v1431 = vld [vmem:[%s6 + $0x110] sm:$0xff]
    %v1432 = vld [vmem:[%s6 + $0x118] sm:$0xff]
    %v1433 = vld [vmem:[%s6 + $0x120] sm:$0xff]
    %v1434 = vld [vmem:[%s6 + $0x128] sm:$0xff]
    %v1435 = vld [vmem:[%s6 + $0x130] sm:$0xff]
    %v1436 = vld [vmem:[%s6 + $0x138] sm:$0xff]
    %v1437 = vld [vmem:[%s6 + $0x140] sm:$0xff]
    %v1438 = vld [vmem:[%s6 + $0x148] sm:$0xff]
    %v1439 = vld [vmem:[%s6 + $0x150] sm:$0xff]
    %v1440 = vld [vmem:[%s6 + $0x158] sm:$0xff]
    %v1441 = vld [vmem:[%s6 + $0x160] sm:$0xff]
    %v1442 = vld [vmem:[%s6 + $0x168] sm:$0xff]
    %v1443 = vld [vmem:[%s6 + $0x170] sm:$0xff]
    %v1444 = vld [vmem:[%s6 + $0x178] sm:$0xff]
    %v1445 = vld [vmem:[%s6 + $0x180] sm:$0xff]
    %v1446 = vld [vmem:[%s6 + $0x188] sm:$0xff]
    %v1447 = vld [vmem:[%s6 + $0x190] sm:$0xff]
    %v1448 = vld [vmem:[%s6 + $0x198] sm:$0xff]
    %v1449 = vld [vmem:[%s6 + $0x1a0] sm:$0xff]
    %v1450 = vld [vmem:[%s6 + $0x1a8] sm:$0xff]
    %v1451 = vld [vmem:[%s6 + $0x1b0] sm:$0xff]
    %v1452 = vld [vmem:[%s6 + $0x1b8] sm:$0xff]
    %v1453 = vld [vmem:[%s6 + $0x1c0] sm:$0xff]
    %v1454 = vld [vmem:[%s6 + $0x1c8] sm:$0xff]
    %v1455 = vld [vmem:[%s6 + $0x1d0] sm:$0xff]
    %v1456 = vld [vmem:[%s6 + $0x1d8] sm:$0xff]
    %v1457 = vld [vmem:[%s6 + $0x1e0] sm:$0xff]
    %v1458 = vld [vmem:[%s6 + $0x1e8] sm:$0xff]
    %v1459 = vld [vmem:[%s6 + $0x1f0] sm:$0xff]
    %v1460 = vld [vmem:[%s6 + $0x1f8] sm:$0xff]
    %v1461 = vld [vmem:[%s6 + $0x200] sm:$0xff]
    %v1462 = vld [vmem:[%s6 + $0x208] sm:$0xff]
    %v1463 = vld [vmem:[%s6 + $0x210] sm:$0xff]
    %v1464 = vld [vmem:[%s6 + $0x218] sm:$0xff]
    %v1466 = vsel %vm51, %v1391, 0
    %v1469 = vsel %vm51, %v1396, 0
    %1471 = vmatprep.subr.mxu0 0.0
    %1472 = vmatpush1.msra.mxu0 %v1412
    %1473 = vmatprep.subr.mxu0 0.0
    %1474 = vmatpush1.msra.mxu0 %v1411
    %1475 = vmatprep.subr.mxu0 0.0
    %1476 = vmatpush1.msra.mxu0 %v1410
    %1477 = vmatprep.subr.mxu0 0.0
    %1478 = vmatpush1.msra.mxu0 %v1409
    %1479 = vmatprep.subr.mxu0 0.0
    %1480 = vmatpush1.msra.mxu0 %v1408
    %1481 = vmatprep.subr.mxu0 0.0
    %1482 = vmatpush1.msra.mxu0 %v1407
    %1483 = vmatprep.subr.mxu0 0.0
    %1484 = vmatpush1.msra.mxu0 %v1406
    %1485 = vmatprep.subr.mxu0 0.0
    %1486 = vmatpush1.msra.mxu0 %v1405
    %1487 = vmatprep.subr.mxu0 0.0
    %1488 = vmatpush1.msra.mxu0 %v1404
    %1489 = vmatprep.subr.mxu0 0.0
    %1490 = vmatpush1.msra.mxu0 %v1403
    %1491 = vmatprep.subr.mxu0 0.0
    %1492 = vmatpush1.msra.mxu0 %v1402
    %1493 = vmatprep.subr.mxu0 0.0
    %1494 = vmatpush1.msra.mxu0 %v1401
    %1495 = vmatprep.subr.mxu0 0.0
    %1496 = vmatpush1.msra.mxu0 %v1400
    %1497 = vmatprep.subr.mxu0 0.0
    %1498 = vmatpush1.msra.mxu0 %v1399
    %1499 = vmatprep.subr.mxu0 0.0
    %1500 = vmatpush1.msra.mxu0 %v1398
    %1501 = vmatprep.subr.mxu0 0.0
    %1502 = vmatpush1.msra.mxu0 %v1397
    %1503 = vmatprep.subr.mxu0 0.0
    %1504 = vmatpush2.msra.mxu0 %v1428
    %1505 = vmatprep.subr.mxu0 0.0
    %1506 = vmatpush2.msra.mxu0 %v1427
    %1507 = vmatprep.subr.mxu0 0.0
    %1508 = vmatpush2.msra.mxu0 %v1426
    %1509 = vmatprep.subr.mxu0 0.0
    %1510 = vmatpush2.msra.mxu0 %v1425
    %1511 = vmatprep.subr.mxu0 0.0
    %1512 = vmatpush2.msra.mxu0 %v1424
    %1513 = vmatprep.subr.mxu0 0.0
    %1514 = vmatpush2.msra.mxu0 %v1423
    %1515 = vmatprep.subr.mxu0 0.0
    %1516 = vmatpush2.msra.mxu0 %v1422
    %1517 = vmatprep.subr.mxu0 0.0
    %1518 = vmatpush2.msra.mxu0 %v1421
    %1519 = vmatprep.subr.mxu0 0.0
    %1520 = vmatpush2.msra.mxu0 %v1420
    %1521 = vmatprep.subr.mxu0 0.0
    %1522 = vmatpush2.msra.mxu0 %v1419
    %1523 = vmatprep.subr.mxu0 0.0
    %1524 = vmatpush2.msra.mxu0 %v1418
    %1525 = vmatprep.subr.mxu0 0.0
    %1526 = vmatpush2.msra.mxu0 %v1417
    %1527 = vmatprep.subr.mxu0 0.0
    %1528 = vmatpush2.msra.mxu0 %v1416
    %1529 = vmatprep.subr.mxu0 0.0
    %1530 = vmatpush2.msra.mxu0 %v1415
    %1531 = vmatprep.subr.mxu0 0.0
    %1532 = vmatpush2.msra.mxu0 %v1414
    %1533 = vmatprep.subr.mxu0 0.0
    %1534 = vmatpush2.msra.mxu0 %v1413
    %1535 = vmatprep.mubr.f32.mxu0 %v1388
    %1536 = vmatmul.mubr.f32.gmra.mxu0 %v1387
    %v1537 = vpop.f32.mrf.mxu0
    %v1538 = vadd.f32 0.0, %v1537
    %v1539 = vpop.f32.mrf.mxu0
    %1540 = vmatprep.mubr.f32.mxu0 %v1393
    %1541 = vmatmul.mubr.f32.gmra.mxu0 %v1392
    %v1542 = vpop.f32.mrf.mxu0
    %v1543 = vadd.f32 0.0, %v1542
    %v1544 = vpop.f32.mrf.mxu0
    %1545 = vdwg.mxu0
    %1546 = vmatprep.subr.mxu0 0.0
    %1547 = vmatpush1.msra.mxu0 %v1444
    %1548 = vmatprep.subr.mxu0 0.0
    %1549 = vmatpush1.msra.mxu0 %v1443
    %1550 = vmatprep.subr.mxu0 0.0
    %1551 = vmatpush1.msra.mxu0 %v1442
    %1552 = vmatprep.subr.mxu0 0.0
    %1553 = vmatpush1.msra.mxu0 %v1441
    %1554 = vmatprep.subr.mxu0 0.0
    %1555 = vmatpush1.msra.mxu0 %v1440
    %1556 = vmatprep.subr.mxu0 0.0
    %1557 = vmatpush1.msra.mxu0 %v1439
    %1558 = vmatprep.subr.mxu0 0.0
    %1559 = vmatpush1.msra.mxu0 %v1438
    %1560 = vmatprep.subr.mxu0 0.0
    %1561 = vmatpush1.msra.mxu0 %v1437
    %1562 = vmatprep.subr.mxu0 0.0
    %1563 = vmatpush1.msra.mxu0 %v1436
    %1564 = vmatprep.subr.mxu0 0.0
    %1565 = vmatpush1.msra.mxu0 %v1435
    %1566 = vmatprep.subr.mxu0 0.0
    %1567 = vmatpush1.msra.mxu0 %v1434
    %1568 = vmatprep.subr.mxu0 0.0
    %1569 = vmatpush1.msra.mxu0 %v1433
    %1570 = vmatprep.subr.mxu0 0.0
    %1571 = vmatpush1.msra.mxu0 %v1432
    %1572 = vmatprep.subr.mxu0 0.0
    %1573 = vmatpush1.msra.mxu0 %v1431
    %1574 = vmatprep.subr.mxu0 0.0
    %1575 = vmatpush1.msra.mxu0 %v1430
    %1576 = vmatprep.subr.mxu0 0.0
    %1577 = vmatpush1.msra.mxu0 %v1429
    %1578 = vmatprep.subr.mxu0 0.0
    %1579 = vmatpush2.msra.mxu0 %v1460
    %1580 = vmatprep.subr.mxu0 0.0
    %1581 = vmatpush2.msra.mxu0 %v1459
    %1582 = vmatprep.subr.mxu0 0.0
    %1583 = vmatpush2.msra.mxu0 %v1458
    %1584 = vmatprep.subr.mxu0 0.0
    %1585 = vmatpush2.msra.mxu0 %v1457
    %1586 = vmatprep.subr.mxu0 0.0
    %1587 = vmatpush2.msra.mxu0 %v1456
    %1588 = vmatprep.subr.mxu0 0.0
    %1589 = vmatpush2.msra.mxu0 %v1455
    %1590 = vmatprep.subr.mxu0 0.0
    %1591 = vmatpush2.msra.mxu0 %v1454
    %1592 = vmatprep.subr.mxu0 0.0
    %1593 = vmatpush2.msra.mxu0 %v1453
    %1594 = vmatprep.subr.mxu0 0.0
    %1595 = vmatpush2.msra.mxu0 %v1452
    %1596 = vmatprep.subr.mxu0 0.0
    %1597 = vmatpush2.msra.mxu0 %v1451
    %1598 = vmatprep.subr.mxu0 0.0
    %1599 = vmatpush2.msra.mxu0 %v1450
    %1600 = vmatprep.subr.mxu0 0.0
    %1601 = vmatpush2.msra.mxu0 %v1449
    %1602 = vmatprep.subr.mxu0 0.0
    %1603 = vmatpush2.msra.mxu0 %v1448
    %1604 = vmatprep.subr.mxu0 0.0
    %1605 = vmatpush2.msra.mxu0 %v1447
    %1606 = vmatprep.subr.mxu0 0.0
    %1607 = vmatpush2.msra.mxu0 %v1446
    %1608 = vmatprep.subr.mxu0 0.0
    %1609 = vmatpush2.msra.mxu0 %v1445
    %1610 = vmatprep.mubr.f32.mxu0 %v1390
    %1611 = vmatmul.mubr.f32.gmra.mxu0 %v1389
    %v1612 = vpop.f32.mrf.mxu0
    %v1613 = vadd.f32 %v1538, %v1612
    %v1614 = vpop.f32.mrf.mxu0
    %1615 = vmatprep.mubr.f32.mxu0 %v1395
    %1616 = vmatmul.mubr.f32.gmra.mxu0 %v1394
    %v1617 = vpop.f32.mrf.mxu0
    %v1618 = vadd.f32 %v1543, %v1617
    %v1619 = vpop.f32.mrf.mxu0
    %1620 = vdwg.mxu0
    %1621 = vmatprep.subr.mxu0 0.0
    %1622 = vmatpush1.msra.mxu0 0.0
    %1623 = vmatprep.subr.mxu0 0.0
    %1624 = vmatpush1.msra.mxu0 0.0
    %1625 = vmatprep.subr.mxu0 0.0
    %1626 = vmatpush1.msra.mxu0 0.0
    %1627 = vmatprep.subr.mxu0 0.0
    %1628 = vmatpush1.msra.mxu0 0.0
    %1629 = vmatprep.subr.mxu0 0.0
    %1630 = vmatpush1.msra.mxu0 0.0
    %1631 = vmatprep.subr.mxu0 0.0
    %1632 = vmatpush1.msra.mxu0 0.0
    %1633 = vmatprep.subr.mxu0 0.0
    %1634 = vmatpush1.msra.mxu0 0.0
    %1635 = vmatprep.subr.mxu0 0.0
    %1636 = vmatpush1.msra.mxu0 0.0
    %1637 = vmatprep.subr.mxu0 0.0
    %1638 = vmatpush1.msra.mxu0 0.0
    %1639 = vmatprep.subr.mxu0 0.0
    %1640 = vmatpush1.msra.mxu0 0.0
    %1641 = vmatprep.subr.mxu0 0.0
    %1642 = vmatpush1.msra.mxu0 0.0
    %1643 = vmatprep.subr.mxu0 0.0
    %1644 = vmatpush1.msra.mxu0 0.0
    %1645 = vmatprep.subr.mxu0 0.0
    %1646 = vmatpush1.msra.mxu0 %v1464
    %1647 = vmatprep.subr.mxu0 0.0
    %1648 = vmatpush1.msra.mxu0 %v1463
    %1649 = vmatprep.subr.mxu0 0.0
    %1650 = vmatpush1.msra.mxu0 %v1462
    %1651 = vmatprep.subr.mxu0 0.0
    %1652 = vmatpush1.msra.mxu0 %v1461
    %1653 = vmatprep.subr.mxu0 0.0
    %1654 = vmatpush2.msra.mxu0 0.0
    %1655 = vmatprep.subr.mxu0 0.0
    %1656 = vmatpush2.msra.mxu0 0.0
    %1657 = vmatprep.subr.mxu0 0.0
    %1658 = vmatpush2.msra.mxu0 0.0
    %1659 = vmatprep.subr.mxu0 0.0
    %1660 = vmatpush2.msra.mxu0 0.0
    %1661 = vmatprep.subr.mxu0 0.0
    %1662 = vmatpush2.msra.mxu0 0.0
    %1663 = vmatprep.subr.mxu0 0.0
    %1664 = vmatpush2.msra.mxu0 0.0
    %1665 = vmatprep.subr.mxu0 0.0
    %1666 = vmatpush2.msra.mxu0 0.0
    %1667 = vmatprep.subr.mxu0 0.0
    %1668 = vmatpush2.msra.mxu0 0.0
    %1669 = vmatprep.subr.mxu0 0.0
    %1670 = vmatpush2.msra.mxu0 0.0
    %1671 = vmatprep.subr.mxu0 0.0
    %1672 = vmatpush2.msra.mxu0 0.0
    %1673 = vmatprep.subr.mxu0 0.0
    %1674 = vmatpush2.msra.mxu0 0.0
    %1675 = vmatprep.subr.mxu0 0.0
    %1676 = vmatpush2.msra.mxu0 0.0
    %1677 = vmatprep.subr.mxu0 0.0
    %1678 = vmatpush2.msra.mxu0 0.0
    %1679 = vmatprep.subr.mxu0 0.0
    %1680 = vmatpush2.msra.mxu0 0.0
    %1681 = vmatprep.subr.mxu0 0.0
    %1682 = vmatpush2.msra.mxu0 0.0
    %1683 = vmatprep.subr.mxu0 0.0
    %1684 = vmatpush2.msra.mxu0 0.0
    %1685 = vmatprep.mubr.f32.mxu0 0.0
    %1686 = vmatmul.mubr.f32.gmra.mxu0 %v1466
    %v1687 = vpop.f32.mrf.mxu0
    %v1688 = vadd.f32 %v1613, %v1687
    %v1689 = vpop.f32.mrf.mxu0
    %1690 = vmatprep.mubr.f32.mxu0 0.0
    %1691 = vmatmul.mubr.f32.gmra.mxu0 %v1469
    %v1692 = vpop.f32.mrf.mxu0
    %v1693 = vadd.f32 %v1618, %v1692
    %v1694 = vpop.f32.mrf.mxu0
    %1695 = vdwg.mxu0
    %vm1696 = vcmask 138240
    %v1697 = vsel %vm1696, %v1688, -inf
    %1698 = vmax.xlane.f32.xlu0 %v1697
    %v1699 = vpop.xlane.xlu0 %1698
    %v1700 = vsel %vm1696, %v1693, -inf
    %1701 = vmax.xlane.f32.xlu0 %v1700
    %v1702 = vpop.xlane.xlu0 %1701
    %v1703 = vsub.f32 %v1688, %v1699
    %v1704 = vsub.f32 %v1693, %v1702
    %v1705 = vmul.f32 %v1703, 1.442695
    %v1706 = vpow.pop %v1705
    %v1707 = vmul.f32 %v1704, 1.442695
    %v1708 = vpow.pop %v1707
    %v1709 = vsel %vm1696, %v1706, 0.0
    %1710 = vadd.xlane.f32.xlu0 %v1709
    %v1711 = vpop.xlane.xlu0 %1710
    %v1712 = vsel %vm1696, %v1708, 0.0
    %1713 = vadd.xlane.f32.xlu0 %v1712
    %v1714 = vpop.xlane.xlu0 %1713
    %v1715 = vrcp.pop %v1711
    %v1716 = vmul.f32 %v1706, %v1715
    %v1717 = vrcp.pop %v1714
    %v1718 = vmul.f32 %v1708, %v1717
    %1721 = vrot.lane.b32.xlu0 %v1716, 16
    %v1722 = vpop.permute.xlu0 %1721
    %1723 = vrot.lane.b32.xlu0 %v1718, 16
    %v1724 = vpop.permute.xlu0 %1723
    %vm1727 = vcmask 130048
    %v1728 = vsel %vm1727, %v1716, %v1722
    %v1729 = vsel %vm1727, %v1718, %v1724
    %v1730 = vld [vmem:[%s7] sm:$0xff]
    %v1731 = vld [vmem:[%s7 + $0x8] sm:$0xff]
    %v1732 = vmul.f32 %v1728, %v1730
    %v1733 = vmul.f32 %v1729, %v1731
    %v1734 = vld [vmem:[%s8] sm:$0xff]
    %v1735 = vld [vmem:[%s8 + $0x8] sm:$0xff]
    %v1736 = vld [vmem:[%s8 + $0x10] sm:$0xff]
    %v1737 = vld [vmem:[%s8 + $0x18] sm:$0xff]
    %1738 = vset.pattern.permute.xlu0 16
    %1739 = vperm.xlu0 %1738, %v1716
    %v1740 = vpop.permute.xlu0 %1739
    %1742 = vset.pattern.permute.xlu0 16
    %1743 = vperm.xlu0 %1742, %v1718
    %v1744 = vpop.permute.xlu0 %1743
    %v1746 = vmul.f32 %v1099, %v1740
    %v1747 = vmul.f32 %v1100, %v1744
    %1750 = vrot.lane.b32.xlu0 %v1746, 96
    %v1751 = vpop.permute.xlu0 %1750
    %1752 = vrot.lane.b32.xlu0 %v1747, 96
    %v1753 = vpop.permute.xlu0 %1752
    %v1757 = vsel %vm51, %v1732, 0
    %v1760 = vsel %vm51, %v1733, 0
    %1762 = vmatprep.subr.mxu0 0.0
    %1763 = vmatpush1.msra.mxu0 0.0
    %1764 = vmatprep.subr.mxu0 0.0
    %1765 = vmatpush1.msra.mxu0 0.0
    %1766 = vmatprep.subr.mxu0 0.0
    %1767 = vmatpush1.msra.mxu0 0.0
    %1768 = vmatprep.subr.mxu0 0.0
    %1769 = vmatpush1.msra.mxu0 0.0
    %1770 = vmatprep.subr.mxu0 0.0
    %1771 = vmatpush1.msra.mxu0 0.0
    %1772 = vmatprep.subr.mxu0 0.0
    %1773 = vmatpush1.msra.mxu0 0.0
    %1774 = vmatprep.subr.mxu0 0.0
    %1775 = vmatpush1.msra.mxu0 0.0
    %1776 = vmatprep.subr.mxu0 0.0
    %1777 = vmatpush1.msra.mxu0 0.0
    %1778 = vmatprep.subr.mxu0 0.0
    %1779 = vmatpush1.msra.mxu0 0.0
    %1780 = vmatprep.subr.mxu0 0.0
    %1781 = vmatpush1.msra.mxu0 0.0
    %1782 = vmatprep.subr.mxu0 0.0
    %1783 = vmatpush1.msra.mxu0 0.0
    %1784 = vmatprep.subr.mxu0 0.0
    %1785 = vmatpush1.msra.mxu0 0.0
    %1786 = vmatprep.subr.mxu0 0.0
    %1787 = vmatpush1.msra.mxu0 %v1737
    %1788 = vmatprep.subr.mxu0 0.0
    %1789 = vmatpush1.msra.mxu0 %v1736
    %1790 = vmatprep.subr.mxu0 0.0
    %1791 = vmatpush1.msra.mxu0 %v1735
    %1792 = vmatprep.subr.mxu0 0.0
    %1793 = vmatpush1.msra.mxu0 %v1734
    %1794 = vmatprep.subr.mxu0 0.0
    %1795 = vmatpush2.msra.mxu0 0.0
    %1796 = vmatprep.subr.mxu0 0.0
    %1797 = vmatpush2.msra.mxu0 0.0
    %1798 = vmatprep.subr.mxu0 0.0
    %1799 = vmatpush2.msra.mxu0 0.0
    %1800 = vmatprep.subr.mxu0 0.0
    %1801 = vmatpush2.msra.mxu0 0.0
    %1802 = vmatprep.subr.mxu0 0.0
    %1803 = vmatpush2.msra.mxu0 0.0
    %1804 = vmatprep.subr.mxu0 0.0
    %1805 = vmatpush2.msra.mxu0 0.0
    %1806 = vmatprep.subr.mxu0 0.0
    %1807 = vmatpush2.msra.mxu0 0.0
    %1808 = vmatprep.subr.mxu0 0.0
    %1809 = vmatpush2.msra.mxu0 0.0
    %1810 = vmatprep.subr.mxu0 0.0
    %1811 = vmatpush2.msra.mxu0 0.0
    %1812 = vmatprep.subr.mxu0 0.0
    %1813 = vmatpush2.msra.mxu0 0.0
    %1814 = vmatprep.subr.mxu0 0.0
    %1815 = vmatpush2.msra.mxu0 0.0
    %1816 = vmatprep.subr.mxu0 0.0
    %1817 = vmatpush2.msra.mxu0 0.0
    %1818 = vmatprep.subr.mxu0 0.0
    %1819 = vmatpush2.msra.mxu0 0.0
    %1820 = vmatprep.subr.mxu0 0.0
    %1821 = vmatpush2.msra.mxu0 0.0
    %1822 = vmatprep.subr.mxu0 0.0
    %1823 = vmatpush2.msra.mxu0 0.0
    %1824 = vmatprep.subr.mxu0 0.0
    %1825 = vmatpush2.msra.mxu0 0.0
    %1826 = vmatprep.mubr.f32.mxu0 0.0
    %1827 = vmatmul.mubr.f32.gmra.mxu0 %v1757
    %v1828 = vpop.f32.mrf.mxu0
    %v1829 = vadd.f32 %v1751, %v1828
    %v1830 = vpop.f32.mrf.mxu0
    %1831 = vmatprep.mubr.f32.mxu0 0.0
    %1832 = vmatmul.mubr.f32.gmra.mxu0 %v1760
    %v1833 = vpop.f32.mrf.mxu0
    %v1834 = vadd.f32 %v1753, %v1833
    %v1835 = vpop.f32.mrf.mxu0
    %1836 = vdwg.mxu0
    %v1837 = vadd.f32 %v1099, %v1829
    %v1838 = vadd.f32 %v1100, %v1834
    %v1839 = vld [vmem:[%s9] sm:$0xff]
    %v1840 = vld [vmem:[%s9 + $0x8] sm:$0xff]
    %v1841 = vld [vmem:[%s9 + $0x10] sm:$0xff]
    %v1842 = vld [vmem:[%s9 + $0x18] sm:$0xff]
    %v1843 = vld [vmem:[%s10] sm:$0x1]
    %v1845 = vlaneseq
    %v1846 = vshrl.u32 %v1845, 7
    %v1847 = vsub.s32 0, %v1846
    %v1848 = vrot.slane %v1843, %v1847
    %v1851 = vsel %vm51, %v1837, 0
    %v1854 = vsel %vm51, %v1838, 0
    %1856 = vmatprep.subr.mxu0 0.0
    %1857 = vmatpush1.msra.mxu0 0.0
    %1858 = vmatprep.subr.mxu0 0.0
    %1859 = vmatpush1.msra.mxu0 0.0
    %1860 = vmatprep.subr.mxu0 0.0
    %1861 = vmatpush1.msra.mxu0 0.0
    %1862 = vmatprep.subr.mxu0 0.0
    %1863 = vmatpush1.msra.mxu0 0.0
    %1864 = vmatprep.subr.mxu0 0.0
    %1865 = vmatpush1.msra.mxu0 0.0
    %1866 = vmatprep.subr.mxu0 0.0
    %1867 = vmatpush1.msra.mxu0 0.0
    %1868 = vmatprep.subr.mxu0 0.0
    %1869 = vmatpush1.msra.mxu0 0.0
    %1870 = vmatprep.subr.mxu0 0.0
    %1871 = vmatpush1.msra.mxu0 0.0
    %1872 = vmatprep.subr.mxu0 0.0
    %1873 = vmatpush1.msra.mxu0 0.0
    %1874 = vmatprep.subr.mxu0 0.0
    %1875 = vmatpush1.msra.mxu0 0.0
    %1876 = vmatprep.subr.mxu0 0.0
    %1877 = vmatpush1.msra.mxu0 0.0
    %1878 = vmatprep.subr.mxu0 0.0
    %1879 = vmatpush1.msra.mxu0 0.0
    %1880 = vmatprep.subr.mxu0 0.0
    %1881 = vmatpush1.msra.mxu0 %v1842
    %1882 = vmatprep.subr.mxu0 0.0
    %1883 = vmatpush1.msra.mxu0 %v1841
    %1884 = vmatprep.subr.mxu0 0.0
    %1885 = vmatpush1.msra.mxu0 %v1840
    %1886 = vmatprep.subr.mxu0 0.0
    %1887 = vmatpush1.msra.mxu0 %v1839
    %1888 = vmatprep.subr.mxu0 0.0
    %1889 = vmatpush2.msra.mxu0 0.0
    %1890 = vmatprep.subr.mxu0 0.0
    %1891 = vmatpush2.msra.mxu0 0.0
    %1892 = vmatprep.subr.mxu0 0.0
    %1893 = vmatpush2.msra.mxu0 0.0
    %1894 = vmatprep.subr.mxu0 0.0
    %1895 = vmatpush2.msra.mxu0 0.0
    %1896 = vmatprep.subr.mxu0 0.0
    %1897 = vmatpush2.msra.mxu0 0.0
    %1898 = vmatprep.subr.mxu0 0.0
    %1899 = vmatpush2.msra.mxu0 0.0
    %1900 = vmatprep.subr.mxu0 0.0
    %1901 = vmatpush2.msra.mxu0 0.0
    %1902 = vmatprep.subr.mxu0 0.0
    %1903 = vmatpush2.msra.mxu0 0.0
    %1904 = vmatprep.subr.mxu0 0.0
    %1905 = vmatpush2.msra.mxu0 0.0
    %1906 = vmatprep.subr.mxu0 0.0
    %1907 = vmatpush2.msra.mxu0 0.0
    %1908 = vmatprep.subr.mxu0 0.0
    %1909 = vmatpush2.msra.mxu0 0.0
    %1910 = vmatprep.subr.mxu0 0.0
    %1911 = vmatpush2.msra.mxu0 0.0
    %1912 = vmatprep.subr.mxu0 0.0
    %1913 = vmatpush2.msra.mxu0 0.0
    %1914 = vmatprep.subr.mxu0 0.0
    %1915 = vmatpush2.msra.mxu0 0.0
    %1916 = vmatprep.subr.mxu0 0.0
    %1917 = vmatpush2.msra.mxu0 0.0
    %1918 = vmatprep.subr.mxu0 0.0
    %1919 = vmatpush2.msra.mxu0 0.0
    %1920 = vmatprep.mubr.f32.mxu0 0.0
    %1921 = vmatmul.mubr.f32.gmra.mxu0 %v1851
    %v1922 = vpop.f32.mrf.mxu0
    %v1923 = vadd.f32 %v1848, %v1922
    %v1924 = vpop.f32.mrf.mxu0
    %1925 = vmatprep.mubr.f32.mxu0 0.0
    %1926 = vmatmul.mubr.f32.gmra.mxu0 %v1854
    %v1927 = vpop.f32.mrf.mxu0
    %v1928 = vadd.f32 %v1848, %v1927
    %v1929 = vpop.f32.mrf.mxu0
    %1930 = vdwg.mxu0
    %1931 = vst [vmem:[#allocation3] sm:$0xff] %v1923
    %1932 = vst [vmem:[#allocation3 + $0x8] sm:$0xff] %v1928
    // Predicated region
    $region46: #{tpu_custom_call.1} parent=1 // pred_check
      _
    $region47: #{tpu_custom_call.1} parent=1 // pred_check_branch
      %1934 = sbr.rel (0) target = $region49
    $region48: #{tpu_custom_call.1} parent=1 // pred_region
      %s1936 = ssub.s32 256, 256
      %1937 = vsyncadd [#allocation4], %s1936
      %s1938 = sshll.u32 [#allocation3], 4
      %s1939 = int_to_ptr.vmem [resolvable:$true] %s1938
      %1944 = dma.vmem_to_hbm [thread:$0]  %s1939, 256, %s11, [#allocation4], 128, 128, 8
    $region49: #{tpu_custom_call.1} parent=1 // pred_fallthru
      _
    // Predicated region
    $region50: #{tpu_custom_call.1} parent=1 // pred_check
      _
    $region51: #{tpu_custom_call.1} parent=1 // pred_check_branch
      %1946 = sbr.rel (0) target = $region53
    $region52: #{tpu_custom_call.1} parent=1 // pred_region
      %1947 = dma.done [#allocation4], 256
    $region53: #{tpu_custom_call.1} parent=1 // pred_fallthru
      _
    %1948 = vsyncpa [#allocation4], 1

</llo_original>
